<compile_context>
chip_gen: v6e
topology: v6e:2x2x1
jax: 0.10.0
libtpu: 0.0.40
codegen_flags: <defaults>
</compile_context>

<pallas_src>
import functools

import jax
import jax.numpy as jnp
from jax import lax
from jax.experimental import pallas as pl
from jax.experimental.pallas import tpu as pltpu


def _linear_attention_kernel(x_ref, wk_ref, wv_ref, wq_ref, wout_ref,
                             mask_ref, bias_ref, y_ref, *, batch_block):
    # x_ref:    (BB, C, N) f32
    # wk_ref:   (hidden, C) f32    k rows of the 1x1 qkv conv
    # wv_ref:   (hidden, C) f32    v rows
    # wq_ref:   (hidden, C) bf16   q rows (only used folded into M)
    # wout_ref: (C, hidden) bf16   to_out 1x1 conv weight
    # mask_ref: (hidden, hidden) bf16   block-diagonal per-head mask
    # bias_ref: (C, 1) f32
    # y_ref:    (BB, C, N) f32
    wk = wk_ref[...]
    wv = wv_ref[...]
    wq_b = wq_ref[...]
    wout_b = wout_ref[...]
    mask_b = mask_ref[...]
    bias = bias_ref[...]
    c_in = x_ref.shape[1]

    def one_example(bb):
        x_b = x_ref[bb]                                   # (C, N) f32
        x_rows = [x_b[c:c + 1, :] for c in range(c_in)]

        # 1x1 qkv conv (contraction dim C=4): VPU broadcast-FMAs.
        # q is never materialized (folded into M below).
        k = wk[:, 0:1] * x_rows[0]
        v = wv[:, 0:1] * x_rows[0]
        for c in range(1, c_in):
            k = k + wk[:, c:c + 1] * x_rows[c]
            v = v + wv[:, c:c + 1] * x_rows[c]
        # TODO(synk): on v6e/v7x the v FMAs could run in bf16 (bf16 VALU) to
        # cut vreg pressure further; kept f32 so one kernel also serves v5e.

        # softmax over N, all heads at once (rows independent), f32.
        k = k - jnp.max(k, axis=-1, keepdims=True)
        ek = jnp.exp(k)
        denom = jnp.sum(ek, axis=-1, keepdims=True)
        kb = (ek * pl.reciprocal(denom, approx=True)).astype(jnp.bfloat16)
        vb = v.astype(jnp.bfloat16)

        # ctxT[e, d] = sum_n v[e, n] * softmax(k)[d, n]   ( == context^T )
        # -- the only dot with a transposed operand; the two below are plain.
        ctxT = lax.dot_general(vb, kb, (((1,), (1,)), ((), ())),
                               preferred_element_type=jnp.float32)
        ctxT_b = ctxT.astype(jnp.bfloat16) * mask_b       # zero cross-head blocks

        # proj = wout · contextᵀ     (C, hidden), standard (M,K)@(K,N)
        proj = jnp.dot(wout_b, ctxT_b, preferred_element_type=jnp.float32)
        # M = proj · Wq              (C, C): folds the q projection away
        m = jnp.dot(proj.astype(jnp.bfloat16), wq_b,
                    preferred_element_type=jnp.float32)

        # y = M · x + bias : C broadcast-FMAs, lane-dense (C, N) store.
        y = m[:, 0:1] * x_rows[0]
        for c in range(1, c_in):
            y = y + m[:, c:c + 1] * x_rows[c]
        y_ref[bb] = y + bias

    if batch_block <= 2:
        for bb in range(batch_block):                     # tiny static unroll
            one_example(bb)
    else:
        def loop_body(bb, carry):
            one_example(bb)
            return carry
        lax.fori_loop(0, batch_block, loop_body, 0, unroll=2)


def linear_attention(x, wqkv, wout, bias, *, heads, batch_block=None):
    b, c, h, w = x.shape
    n = h * w
    hidden = wout.shape[1]
    assert wqkv.shape[0] == 3 * hidden and hidden % heads == 0
    dh = hidden // heads

    if batch_block is None:
        # Amortize per-grid-step pipeline overhead with bigger blocks, but
        # keep >=2 "parallel" grid steps so both v7x TensorCores get work.
        batch_block = max(1, min(8, b // 2))
        while b % batch_block:
            batch_block -= 1
    assert b % batch_block == 0

    x_flat = x.reshape(b, c, n).astype(jnp.float32)

    # Weight prep hoisted out of the kernel: split qkv rows, pre-cast the
    # MXU-only operands to bf16 (halves their DMA bytes), keep the k/v FMA
    # weights in f32 for softmax accuracy, precompute the head mask once.
    wq_b = wqkv[0 * hidden:1 * hidden].astype(jnp.bfloat16)   # (hidden, C)
    wk = wqkv[1 * hidden:2 * hidden].astype(jnp.float32)      # (hidden, C)
    wv = wqkv[2 * hidden:3 * hidden].astype(jnp.float32)      # (hidden, C)
    wout_b = wout.astype(jnp.bfloat16)                        # (C, hidden)
    bias2 = bias.reshape(-1, 1).astype(jnp.float32)           # (C, 1)
    ids = jnp.arange(hidden, dtype=jnp.int32)
    head_mask = (ids[:, None] // dh == ids[None, :] // dh).astype(jnp.bfloat16)

    kernel = functools.partial(_linear_attention_kernel,
                               batch_block=batch_block)
    y = pl.pallas_call(
        kernel,
        out_shape=jax.ShapeDtypeStruct((b, c, n), jnp.float32),
        grid=(b // batch_block,),
        in_specs=[
            pl.BlockSpec((batch_block, c, n), lambda i: (i, 0, 0)),
            pl.BlockSpec((hidden, c), lambda i: (0, 0)),
            pl.BlockSpec((hidden, c), lambda i: (0, 0)),
            pl.BlockSpec((hidden, c), lambda i: (0, 0)),
            pl.BlockSpec((c, hidden), lambda i: (0, 0)),
            pl.BlockSpec((hidden, hidden), lambda i: (0, 0)),
            pl.BlockSpec((c, 1), lambda i: (0, 0)),
        ],
        out_specs=pl.BlockSpec((batch_block, c, n), lambda i: (i, 0, 0)),
        compiler_params=pltpu.CompilerParams(
            dimension_semantics=("parallel",),   # batch grid -> both TCs on v7x
            vmem_limit_bytes=32 * 1024 * 1024),  # safe on v7x's 64 MiB VMEM
    )(x_flat, wk, wv, wq_b, wout_b, head_mask, bias2)
    return y.reshape(b, c, h, w)


def _reference(x, wqkv, wout, bias, *, heads):
    # pure-JAX reference mirroring the PyTorch forward
    b, c, h, w = x.shape
    n = h * w
    hidden = wout.shape[1]
    dh = hidden // heads
    x_flat = x.reshape(b, c, n)
    qkv = jnp.einsum('oc,bcn->bon', wqkv, x_flat)            # (b, 3*hidden, n)
    qkv = qkv.reshape(b, 3, heads, dh, n)
    q, k, v = qkv[:, 0], qkv[:, 1], qkv[:, 2]                # (b, heads, dh, n)
    k = jax.nn.softmax(k, axis=-1)
    context = jnp.einsum('bhdn,bhen->bhde', k, v)
    out = jnp.einsum('bhde,bhdn->bhen', context, q)          # (b, heads, dh, n)
    out = out.reshape(b, hidden, n)
    y = jnp.einsum('oc,bcn->bon', wout, out) + bias[None, :, None]
    return y.reshape(b, c, h, w)


if __name__ == "__main__":
    # module config
    dim = 4
    heads = 4
    dim_head = 32
    hidden = heads * dim_head          # 128

    key = jax.random.PRNGKey(0)
    kx, kq, ko, kb = jax.random.split(key, 4)
    x = jax.random.normal(kx, (2, dim, 16, 16), dtype=jnp.float32)

    # deterministic parameter init (1x1 convs collapse to channel matmuls)
    wqkv = 0.1 * jax.random.normal(kq, (hidden * 3, dim), dtype=jnp.float32)
    wout = 0.1 * jax.random.normal(ko, (dim, hidden), dtype=jnp.float32)
    bias = 0.1 * jax.random.normal(kb, (dim,), dtype=jnp.float32)

    # B=2 -> batch_block=1, grid=(2,): small-block / static-unroll path.
    y = jax.block_until_ready(linear_attention(x, wqkv, wout, bias, heads=heads))
    y_ref = _reference(x, wqkv, wout, bias, heads=heads)
    assert jnp.allclose(y, y_ref, atol=5e-3, rtol=5e-3), "mismatch vs reference"

    # B=8 -> batch_block=4, grid=(2,): exercises the larger-block fori_loop
    # path that amortizes per-grid-step overhead while keeping 2 parallel steps.
    x8 = jax.random.normal(jax.random.PRNGKey(1), (8, dim, 16, 16),
                           dtype=jnp.float32)
    y8 = jax.block_until_ready(linear_attention(x8, wqkv, wout, bias, heads=heads))
    y8_ref = _reference(x8, wqkv, wout, bias, heads=heads)
    assert jnp.allclose(y8, y8_ref, atol=5e-3, rtol=5e-3), "mismatch vs reference (B=8)"

    print("KERNEL_OK")
</pallas_src>

<mosaic_0001>
module attributes {stable_mosaic.version = 11 : i64} {
  func.func @_linear_attention_kernel(%arg0: i32, %arg1: memref<1x4x256xf32, #tpu.memory_space<vmem>>, %arg2: memref<128x4xf32, #tpu.memory_space<vmem>>, %arg3: memref<128x4xf32, #tpu.memory_space<vmem>>, %arg4: memref<128x4xbf16, #tpu.memory_space<vmem>>, %arg5: memref<4x128xbf16, #tpu.memory_space<vmem>>, %arg6: memref<128x128xbf16, #tpu.memory_space<vmem>>, %arg7: memref<4x1xf32, #tpu.memory_space<vmem>>, %arg8: memref<1x4x256xf32, #tpu.memory_space<vmem>>) attributes {dimension_semantics = [#tpu.dimension_semantics<parallel>], iteration_bounds = array<i64: 2>, scalar_prefetch = 0 : i64, scratch_operands = 0 : i64, tpu.core_type = #tpu.core_type<tc>, window_params = [{transform_indices = @transform_0, window_bounds = array<i64: 1, 4, 256>}, {pipeline_mode = #tpu.pipeline_mode<synchronous>, transform_indices = @transform_1, window_bounds = array<i64: 128, 4>}, {pipeline_mode = #tpu.pipeline_mode<synchronous>, transform_indices = @transform_2, window_bounds = array<i64: 128, 4>}, {pipeline_mode = #tpu.pipeline_mode<synchronous>, transform_indices = @transform_3, window_bounds = array<i64: 128, 4>}, {pipeline_mode = #tpu.pipeline_mode<synchronous>, transform_indices = @transform_4, window_bounds = array<i64: 4, 128>}, {pipeline_mode = #tpu.pipeline_mode<synchronous>, transform_indices = @transform_5, window_bounds = array<i64: 128, 128>}, {pipeline_mode = #tpu.pipeline_mode<synchronous>, transform_indices = @transform_6, window_bounds = array<i64: 4, 1>}, {transform_indices = @transform_7, window_bounds = array<i64: 1, 4, 256>}]} {
    %c0 = arith.constant 0 : index
    %c0_0 = arith.constant 0 : index
    %0 = vector.load %arg2[%c0, %c0_0] : memref<128x4xf32, #tpu.memory_space<vmem>>, vector<128x4xf32>
    %c0_1 = arith.constant 0 : index
    %c0_2 = arith.constant 0 : index
    %1 = vector.load %arg3[%c0_1, %c0_2] : memref<128x4xf32, #tpu.memory_space<vmem>>, vector<128x4xf32>
    %c0_3 = arith.constant 0 : index
    %c0_4 = arith.constant 0 : index
    %2 = vector.load %arg4[%c0_3, %c0_4] : memref<128x4xbf16, #tpu.memory_space<vmem>>, vector<128x4xbf16>
    %c0_5 = arith.constant 0 : index
    %c0_6 = arith.constant 0 : index
    %3 = vector.load %arg5[%c0_5, %c0_6] : memref<4x128xbf16, #tpu.memory_space<vmem>>, vector<4x128xbf16>
    %c0_7 = arith.constant 0 : index
    %c0_8 = arith.constant 0 : index
    %4 = vector.load %arg6[%c0_7, %c0_8] : memref<128x128xbf16, #tpu.memory_space<vmem>>, vector<128x128xbf16>
    %c0_9 = arith.constant 0 : index
    %c0_10 = arith.constant 0 : index
    %5 = vector.load %arg7[%c0_9, %c0_10] : memref<4x1xf32, #tpu.memory_space<vmem>>, vector<4x1xf32>
    %c0_11 = arith.constant 0 : index
    %c0_12 = arith.constant 0 : index
    %c0_13 = arith.constant 0 : index
    %6 = vector.load %arg1[%c0_11, %c0_12, %c0_13] : memref<1x4x256xf32, #tpu.memory_space<vmem>>, vector<1x4x256xf32>
    %7 = vector.shape_cast %6 : vector<1x4x256xf32> to vector<4x256xf32>
    %8 = vector.extract_strided_slice %7 {offsets = [0, 0], sizes = [1, 256], strides = [1, 1]} : vector<4x256xf32> to vector<1x256xf32>
    %9 = vector.extract_strided_slice %7 {offsets = [1, 0], sizes = [1, 256], strides = [1, 1]} : vector<4x256xf32> to vector<1x256xf32>
    %10 = vector.extract_strided_slice %7 {offsets = [2, 0], sizes = [1, 256], strides = [1, 1]} : vector<4x256xf32> to vector<1x256xf32>
    %11 = vector.extract_strided_slice %7 {offsets = [3, 0], sizes = [1, 256], strides = [1, 1]} : vector<4x256xf32> to vector<1x256xf32>
    %12 = vector.extract_strided_slice %0 {offsets = [0, 0], sizes = [128, 1], strides = [1, 1]} : vector<128x4xf32> to vector<128x1xf32>
    %13 = vector.broadcast %12 : vector<128x1xf32> to vector<128x256xf32>
    %14 = vector.broadcast %8 : vector<1x256xf32> to vector<128x256xf32>
    %15 = arith.mulf %13, %14 : vector<128x256xf32>
    %16 = vector.extract_strided_slice %1 {offsets = [0, 0], sizes = [128, 1], strides = [1, 1]} : vector<128x4xf32> to vector<128x1xf32>
    %17 = vector.broadcast %16 : vector<128x1xf32> to vector<128x256xf32>
    %18 = vector.broadcast %8 : vector<1x256xf32> to vector<128x256xf32>
    %19 = arith.mulf %17, %18 : vector<128x256xf32>
    %20 = vector.extract_strided_slice %0 {offsets = [0, 1], sizes = [128, 1], strides = [1, 1]} : vector<128x4xf32> to vector<128x1xf32>
    %21 = vector.broadcast %20 : vector<128x1xf32> to vector<128x256xf32>
    %22 = vector.broadcast %9 : vector<1x256xf32> to vector<128x256xf32>
    %23 = arith.mulf %21, %22 : vector<128x256xf32>
    %24 = arith.addf %15, %23 : vector<128x256xf32>
    %25 = vector.extract_strided_slice %1 {offsets = [0, 1], sizes = [128, 1], strides = [1, 1]} : vector<128x4xf32> to vector<128x1xf32>
    %26 = vector.broadcast %25 : vector<128x1xf32> to vector<128x256xf32>
    %27 = vector.broadcast %9 : vector<1x256xf32> to vector<128x256xf32>
    %28 = arith.mulf %26, %27 : vector<128x256xf32>
    %29 = arith.addf %19, %28 : vector<128x256xf32>
    %30 = vector.extract_strided_slice %0 {offsets = [0, 2], sizes = [128, 1], strides = [1, 1]} : vector<128x4xf32> to vector<128x1xf32>
    %31 = vector.broadcast %30 : vector<128x1xf32> to vector<128x256xf32>
    %32 = vector.broadcast %10 : vector<1x256xf32> to vector<128x256xf32>
    %33 = arith.mulf %31, %32 : vector<128x256xf32>
    %34 = arith.addf %24, %33 : vector<128x256xf32>
    %35 = vector.extract_strided_slice %1 {offsets = [0, 2], sizes = [128, 1], strides = [1, 1]} : vector<128x4xf32> to vector<128x1xf32>
    %36 = vector.broadcast %35 : vector<128x1xf32> to vector<128x256xf32>
    %37 = vector.broadcast %10 : vector<1x256xf32> to vector<128x256xf32>
    %38 = arith.mulf %36, %37 : vector<128x256xf32>
    %39 = arith.addf %29, %38 : vector<128x256xf32>
    %40 = vector.extract_strided_slice %0 {offsets = [0, 3], sizes = [128, 1], strides = [1, 1]} : vector<128x4xf32> to vector<128x1xf32>
    %41 = vector.broadcast %40 : vector<128x1xf32> to vector<128x256xf32>
    %42 = vector.broadcast %11 : vector<1x256xf32> to vector<128x256xf32>
    %43 = arith.mulf %41, %42 : vector<128x256xf32>
    %44 = arith.addf %34, %43 : vector<128x256xf32>
    %45 = vector.extract_strided_slice %1 {offsets = [0, 3], sizes = [128, 1], strides = [1, 1]} : vector<128x4xf32> to vector<128x1xf32>
    %46 = vector.broadcast %45 : vector<128x1xf32> to vector<128x256xf32>
    %47 = vector.broadcast %11 : vector<1x256xf32> to vector<128x256xf32>
    %48 = arith.mulf %46, %47 : vector<128x256xf32>
    %49 = arith.addf %39, %48 : vector<128x256xf32>
    %cst = arith.constant dense<0xFF800000> : vector<128xf32>
    %50 = vector.multi_reduction <maximumf>, %44, %cst [1] : vector<128x256xf32> to vector<128xf32>
    %51 = vector.shape_cast %50 : vector<128xf32> to vector<128x1xf32>
    %52 = vector.broadcast %51 : vector<128x1xf32> to vector<128x256xf32>
    %53 = arith.subf %44, %52 : vector<128x256xf32>
    %54 = math.exp %53 : vector<128x256xf32>
    %cst_14 = arith.constant dense<0.000000e+00> : vector<128xf32>
    %55 = vector.multi_reduction <add>, %54, %cst_14 [1] : vector<128x256xf32> to vector<128xf32>
    %56 = vector.shape_cast %55 : vector<128xf32> to vector<128x1xf32>
    %57 = tpu.reciprocal %56 {approx = true} : vector<128x1xf32> -> vector<128x1xf32>
    %58 = vector.broadcast %57 : vector<128x1xf32> to vector<128x256xf32>
    %59 = arith.mulf %54, %58 : vector<128x256xf32>
    %60 = arith.truncf %59 : vector<128x256xf32> to vector<128x256xbf16>
    %61 = arith.truncf %49 : vector<128x256xf32> to vector<128x256xbf16>
    %cst_15 = arith.constant dense<0.000000e+00> : vector<128x128xf32>
    %62 = tpu.matmul %61, %60, %cst_15 {dimension_numbers = #tpu.dot_dimension_numbers<[1], [1], [0], [0], [0, 0, 1, 0], [], []>} : vector<128x256xbf16>, vector<128x256xbf16>, vector<128x128xf32> -> vector<128x128xf32>
    %63 = arith.truncf %62 : vector<128x128xf32> to vector<128x128xbf16>
    %64 = arith.mulf %63, %4 : vector<128x128xbf16>
    %cst_16 = arith.constant dense<0.000000e+00> : vector<4x128xf32>
    %65 = tpu.matmul %3, %64, %cst_16 {dimension_numbers = #tpu.dot_dimension_numbers<[1], [0], [0], [1], [0, 0, 1, 1], [], []>} : vector<4x128xbf16>, vector<128x128xbf16>, vector<4x128xf32> -> vector<4x128xf32>
    %66 = arith.truncf %65 : vector<4x128xf32> to vector<4x128xbf16>
    %cst_17 = arith.constant dense<0.000000e+00> : vector<4x4xf32>
    %67 = tpu.matmul %66, %2, %cst_17 {dimension_numbers = #tpu.dot_dimension_numbers<[1], [0], [0], [1], [0, 0, 1, 1], [], []>} : vector<4x128xbf16>, vector<128x4xbf16>, vector<4x4xf32> -> vector<4x4xf32>
    %68 = vector.extract_strided_slice %67 {offsets = [0, 0], sizes = [4, 1], strides = [1, 1]} : vector<4x4xf32> to vector<4x1xf32>
    %69 = vector.broadcast %68 : vector<4x1xf32> to vector<4x256xf32>
    %70 = vector.broadcast %8 : vector<1x256xf32> to vector<4x256xf32>
    %71 = arith.mulf %69, %70 : vector<4x256xf32>
    %72 = vector.extract_strided_slice %67 {offsets = [0, 1], sizes = [4, 1], strides = [1, 1]} : vector<4x4xf32> to vector<4x1xf32>
    %73 = vector.broadcast %72 : vector<4x1xf32> to vector<4x256xf32>
    %74 = vector.broadcast %9 : vector<1x256xf32> to vector<4x256xf32>
    %75 = arith.mulf %73, %74 : vector<4x256xf32>
    %76 = arith.addf %71, %75 : vector<4x256xf32>
    %77 = vector.extract_strided_slice %67 {offsets = [0, 2], sizes = [4, 1], strides = [1, 1]} : vector<4x4xf32> to vector<4x1xf32>
    %78 = vector.broadcast %77 : vector<4x1xf32> to vector<4x256xf32>
    %79 = vector.broadcast %10 : vector<1x256xf32> to vector<4x256xf32>
    %80 = arith.mulf %78, %79 : vector<4x256xf32>
    %81 = arith.addf %76, %80 : vector<4x256xf32>
    %82 = vector.extract_strided_slice %67 {offsets = [0, 3], sizes = [4, 1], strides = [1, 1]} : vector<4x4xf32> to vector<4x1xf32>
    %83 = vector.broadcast %82 : vector<4x1xf32> to vector<4x256xf32>
    %84 = vector.broadcast %11 : vector<1x256xf32> to vector<4x256xf32>
    %85 = arith.mulf %83, %84 : vector<4x256xf32>
    %86 = arith.addf %81, %85 : vector<4x256xf32>
    %87 = vector.broadcast %5 : vector<4x1xf32> to vector<4x256xf32>
    %88 = arith.addf %86, %87 : vector<4x256xf32>
    %c0_18 = arith.constant 0 : index
    %c0_19 = arith.constant 0 : index
    %c0_20 = arith.constant 0 : index
    %89 = vector.load %arg8[%c0_18, %c0_19, %c0_20] : memref<1x4x256xf32, #tpu.memory_space<vmem>>, vector<1x4x256xf32>
    %90 = vector.shape_cast %89 : vector<1x4x256xf32> to vector<4x256xf32>
    %91 = vector.shape_cast %88 : vector<4x256xf32> to vector<1x4x256xf32>
    tpu.vector_store %arg8[%c0_18, %c0_19, %c0_20], %91 {strides = array<i32>} : memref<1x4x256xf32, #tpu.memory_space<vmem>>, vector<1x4x256xf32>,
    return
  }
  func.func @transform_0(%arg0: i32) -> (i32, i32, i32) {
    %c0_i32 = arith.constant 0 : i32
    %c0_i32_0 = arith.constant 0 : i32
    %c0_i32_1 = arith.constant 0 : i32
    return %arg0, %c0_i32, %c0_i32_0 : i32, i32, i32
  }
  func.func @transform_1(%arg0: i32) -> (i32, i32) {
    %c0_i32 = arith.constant 0 : i32
    %c0_i32_0 = arith.constant 0 : i32
    %c0_i32_1 = arith.constant 0 : i32
    return %c0_i32, %c0_i32_0 : i32, i32
  }
  func.func @transform_2(%arg0: i32) -> (i32, i32) {
    %c0_i32 = arith.constant 0 : i32
    %c0_i32_0 = arith.constant 0 : i32
    %c0_i32_1 = arith.constant 0 : i32
    return %c0_i32, %c0_i32_0 : i32, i32
  }
  func.func @transform_3(%arg0: i32) -> (i32, i32) {
    %c0_i32 = arith.constant 0 : i32
    %c0_i32_0 = arith.constant 0 : i32
    %c0_i32_1 = arith.constant 0 : i32
    return %c0_i32, %c0_i32_0 : i32, i32
  }
  func.func @transform_4(%arg0: i32) -> (i32, i32) {
    %c0_i32 = arith.constant 0 : i32
    %c0_i32_0 = arith.constant 0 : i32
    %c0_i32_1 = arith.constant 0 : i32
    return %c0_i32, %c0_i32_0 : i32, i32
  }
  func.func @transform_5(%arg0: i32) -> (i32, i32) {
    %c0_i32 = arith.constant 0 : i32
    %c0_i32_0 = arith.constant 0 : i32
    %c0_i32_1 = arith.constant 0 : i32
    return %c0_i32, %c0_i32_0 : i32, i32
  }
  func.func @transform_6(%arg0: i32) -> (i32, i32) {
    %c0_i32 = arith.constant 0 : i32
    %c0_i32_0 = arith.constant 0 : i32
    %c0_i32_1 = arith.constant 0 : i32
    return %c0_i32, %c0_i32_0 : i32, i32
  }
  func.func @transform_7(%arg0: i32) -> (i32, i32, i32) {
    %c0_i32 = arith.constant 0 : i32
    %c0_i32_0 = arith.constant 0 : i32
    %c0_i32_1 = arith.constant 0 : i32
    return %arg0, %c0_i32, %c0_i32_0 : i32, i32, i32
  }
}

</mosaic_0001>

<llo_original>
// kernel: tpu_custom_call.1
$region0: #{tpu_custom_call.1}
  #allocation0 [shape = 'u32[]', space=smem, size = 0x4, offset = 0x4, fixed_abs, tag = 'smem constant byte address 0x4 - core index']
  #allocation1 [shape = 'u32[144,128]{1,0:T(1,128)}', space=vmem, size = 0x12000, scoped, tag = 'internal scratch']
  %s0 = inlined_call_operand.vmem [shape: f32[2,4,256], index: 0, kind: input, shape index: {}]
  %s1 = inlined_call_operand.vmem [shape: f32[128,4], index: 1, kind: input, shape index: {}]
  %s2 = inlined_call_operand.vmem [shape: f32[128,4], index: 2, kind: input, shape index: {}]
  %s3 = inlined_call_operand.vmem [shape: bf16[128,4], index: 3, kind: input, shape index: {}]
  %s4 = inlined_call_operand.vmem [shape: bf16[4,128], index: 4, kind: input, shape index: {}]
  %s5 = inlined_call_operand.vmem [shape: bf16[128,128], index: 5, kind: input, shape index: {}]
  %s6 = inlined_call_operand.vmem [shape: f32[4,1], index: 6, kind: input, shape index: {}]
  %s7 = inlined_call_operand.hbm [shape: f32[2,4,256], index: 7, kind: output, shape index: {}]
  %s8 = sld [smem:[#allocation0]]
  $region61: #{tpu_custom_call.1} parent=0
    _
  %s10 = ssub.s32 1, %s8
  %s11 = scalar_select 0, %s10, %s8
  $region1: #{tpu_custom_call.1} parent=0
    #allocation2 [shape = 'u8[8192]{0}', space=vmem, size = 0x2000, scoped, tag = 'output window, operand 0']
    #allocation3 [shape = 's32[2]{0}', space=sflag, size = 0x8, scoped, tag = 'scoped memory for tpu_custom_call.1']
    %12 = vsyncpa [#allocation3], 0
    %s13 = scalar_lea.sflag [#allocation3], 1
    %14 = vsyncpa %s13, 0
    loop: start=0, step=1, limit=4
    $region2: #{tpu_custom_call.1} parent=1 // loop_pre_header
      _
    $region3: #{tpu_custom_call.1} parent=1 // loop_header
      %s16 = sphi 0, %s20
      %p17 = scmp.ge.s32.totalorder %s16, 4
      %s26 = sphi 0, %s28
      %s29 = sphi 0, %s26
      %s30 = sphi 0, %s29
      %s46 = sphi 0, %s30
      %s50 = sphi 0, %s50
      %s52 = sphi 0, %s50
      %s53 = sphi 0, %s52
      %s67 = sphi 0, %s53
      %s71 = sphi 0, %s71
      %s73 = sphi 0, %s71
      %s74 = sphi 0, %s73
      %s88 = sphi 0, %s74
      %s92 = sphi 0, %s92
      %s94 = sphi 0, %s92
      %s95 = sphi 0, %s94
      %s109 = sphi 0, %s95
      %s113 = sphi 0, %s113
      %s115 = sphi 0, %s113
      %s116 = sphi 0, %s115
      %s130 = sphi 0, %s116
      %s134 = sphi 0, %s134
      %s136 = sphi 0, %s134
      %s137 = sphi 0, %s136
      %s151 = sphi 0, %s137
      %s155 = sphi 0, %s155
      %s157 = sphi 0, %s155
      %s158 = sphi 0, %s157
      %s172 = sphi 0, %s158
      %s178 = sphi 0, %s180
      %s181 = sphi 0, %s178
      %s182 = sphi 0, %s181
      %s198 = sphi 0, %s182
    $region4: #{tpu_custom_call.1} parent=1 // loop_header_branch
      %19 = sbr.rel (%p17) target = $region8
    $region5: #{tpu_custom_call.1} parent=1 // loop_body
      %s21 = ssub.s32 %s16, 1
      %s22 = ssub.s32 %s16, 2
      %s23 = sadd.s32 %s16, 1
      %s24 = ssub.s32 %s16, %s23
      %p25 = scmp.eq.s32.totalorder %s24, 0
      %s27 = sadd.s32 %s26, 1
      %s28 = scalar_select %p25, %s26, %s27
      %p31 = pneg %p25
      %p32 = scmp.eq.s32.totalorder %s16, 1
      %p33 = por %p31, %p32
      %p34 = scmp.ne.s32.totalorder %s26, %s29
      %p35 = scmp.eq.s32.totalorder %s16, 0
      %p36 = por %p34, %p35
      %p37 = scmp.ne.s32.totalorder %s26, %s29
      %p38 = scmp.eq.s32.totalorder %s21, 1
      %p39 = por %p37, %p38
      %p40 = scmp.ne.s32.totalorder %s29, %s30
      %p41 = scmp.eq.s32.totalorder %s21, 0
      %p42 = por %p40, %p41
      %p43 = scmp.ne.s32.totalorder %s29, %s30
      %p44 = scmp.eq.s32.totalorder %s22, 1
      %p45 = por %p43, %p44
      %p47 = scmp.ne.s32.totalorder %s30, %s46
      %p48 = scmp.eq.s32.totalorder %s22, 0
      %p49 = por %p47, %p48
      %s51 = sadd.s32 %s50, 1
      %p54 = scmp.eq.s32.totalorder %s16, 1
      %p55 = scmp.ne.s32.totalorder %s50, %s52
      %p56 = scmp.eq.s32.totalorder %s16, 0
      %p57 = por %p55, %p56
      %p58 = scmp.ne.s32.totalorder %s50, %s52
      %p59 = scmp.eq.s32.totalorder %s21, 1
      %p60 = por %p58, %p59
      %p61 = scmp.ne.s32.totalorder %s52, %s53
      %p62 = scmp.eq.s32.totalorder %s21, 0
      %p63 = por %p61, %p62
      %p64 = scmp.ne.s32.totalorder %s52, %s53
      %p65 = scmp.eq.s32.totalorder %s22, 1
      %p66 = por %p64, %p65
      %p68 = scmp.ne.s32.totalorder %s53, %s67
      %p69 = scmp.eq.s32.totalorder %s22, 0
      %p70 = por %p68, %p69
      %s72 = sadd.s32 %s71, 1
      %p75 = scmp.eq.s32.totalorder %s16, 1
      %p76 = scmp.ne.s32.totalorder %s71, %s73
      %p77 = scmp.eq.s32.totalorder %s16, 0
      %p78 = por %p76, %p77
      %p79 = scmp.ne.s32.totalorder %s71, %s73
      %p80 = scmp.eq.s32.totalorder %s21, 1
      %p81 = por %p79, %p80
      %p82 = scmp.ne.s32.totalorder %s73, %s74
      %p83 = scmp.eq.s32.totalorder %s21, 0
      %p84 = por %p82, %p83
      %p85 = scmp.ne.s32.totalorder %s73, %s74
      %p86 = scmp.eq.s32.totalorder %s22, 1
      %p87 = por %p85, %p86
      %p89 = scmp.ne.s32.totalorder %s74, %s88
      %p90 = scmp.eq.s32.totalorder %s22, 0
      %p91 = por %p89, %p90
      %s93 = sadd.s32 %s92, 1
      %p96 = scmp.eq.s32.totalorder %s16, 1
      %p97 = scmp.ne.s32.totalorder %s92, %s94
      %p98 = scmp.eq.s32.totalorder %s16, 0
      %p99 = por %p97, %p98
      %p100 = scmp.ne.s32.totalorder %s92, %s94
      %p101 = scmp.eq.s32.totalorder %s21, 1
      %p102 = por %p100, %p101
      %p103 = scmp.ne.s32.totalorder %s94, %s95
      %p104 = scmp.eq.s32.totalorder %s21, 0
      %p105 = por %p103, %p104
      %p106 = scmp.ne.s32.totalorder %s94, %s95
      %p107 = scmp.eq.s32.totalorder %s22, 1
      %p108 = por %p106, %p107
      %p110 = scmp.ne.s32.totalorder %s95, %s109
      %p111 = scmp.eq.s32.totalorder %s22, 0
      %p112 = por %p110, %p111
      %s114 = sadd.s32 %s113, 1
      %p117 = scmp.eq.s32.totalorder %s16, 1
      %p118 = scmp.ne.s32.totalorder %s113, %s115
      %p119 = scmp.eq.s32.totalorder %s16, 0
      %p120 = por %p118, %p119
      %p121 = scmp.ne.s32.totalorder %s113, %s115
      %p122 = scmp.eq.s32.totalorder %s21, 1
      %p123 = por %p121, %p122
      %p124 = scmp.ne.s32.totalorder %s115, %s116
      %p125 = scmp.eq.s32.totalorder %s21, 0
      %p126 = por %p124, %p125
      %p127 = scmp.ne.s32.totalorder %s115, %s116
      %p128 = scmp.eq.s32.totalorder %s22, 1
      %p129 = por %p127, %p128
      %p131 = scmp.ne.s32.totalorder %s116, %s130
      %p132 = scmp.eq.s32.totalorder %s22, 0
      %p133 = por %p131, %p132
      %s135 = sadd.s32 %s134, 1
      %p138 = scmp.eq.s32.totalorder %s16, 1
      %p139 = scmp.ne.s32.totalorder %s134, %s136
      %p140 = scmp.eq.s32.totalorder %s16, 0
      %p141 = por %p139, %p140
      %p142 = scmp.ne.s32.totalorder %s134, %s136
      %p143 = scmp.eq.s32.totalorder %s21, 1
      %p144 = por %p142, %p143
      %p145 = scmp.ne.s32.totalorder %s136, %s137
      %p146 = scmp.eq.s32.totalorder %s21, 0
      %p147 = por %p145, %p146
      %p148 = scmp.ne.s32.totalorder %s136, %s137
      %p149 = scmp.eq.s32.totalorder %s22, 1
      %p150 = por %p148, %p149
      %p152 = scmp.ne.s32.totalorder %s137, %s151
      %p153 = scmp.eq.s32.totalorder %s22, 0
      %p154 = por %p152, %p153
      %s156 = sadd.s32 %s155, 1
      %p159 = scmp.eq.s32.totalorder %s16, 1
      %p160 = scmp.ne.s32.totalorder %s155, %s157
      %p161 = scmp.eq.s32.totalorder %s16, 0
      %p162 = por %p160, %p161
      %p163 = scmp.ne.s32.totalorder %s155, %s157
      %p164 = scmp.eq.s32.totalorder %s21, 1
      %p165 = por %p163, %p164
      %p166 = scmp.ne.s32.totalorder %s157, %s158
      %p167 = scmp.eq.s32.totalorder %s21, 0
      %p168 = por %p166, %p167
      %p169 = scmp.ne.s32.totalorder %s157, %s158
      %p170 = scmp.eq.s32.totalorder %s22, 1
      %p171 = por %p169, %p170
      %p173 = scmp.ne.s32.totalorder %s158, %s172
      %p174 = scmp.eq.s32.totalorder %s22, 0
      %p175 = por %p173, %p174
      %s176 = ssub.s32 %s16, %s23
      %p177 = scmp.eq.s32.totalorder %s176, 0
      %s179 = sadd.s32 %s178, 1
      %s180 = scalar_select %p177, %s178, %s179
      %p183 = pneg %p177
      %p184 = scmp.eq.s32.totalorder %s16, 1
      %p185 = por %p183, %p184
      %p186 = scmp.ne.s32.totalorder %s178, %s181
      %p187 = scmp.eq.s32.totalorder %s16, 0
      %p188 = por %p186, %p187
      %p189 = scmp.ne.s32.totalorder %s178, %s181
      %p190 = scmp.eq.s32.totalorder %s21, 1
      %p191 = por %p189, %p190
      %p192 = scmp.ne.s32.totalorder %s181, %s182
      %p193 = scmp.eq.s32.totalorder %s21, 0
      %p194 = por %p192, %p193
      %p195 = scmp.ne.s32.totalorder %s181, %s182
      %p196 = scmp.eq.s32.totalorder %s22, 1
      %p197 = por %p195, %p196
      %p199 = scmp.ne.s32.totalorder %s182, %s198
      %p200 = scmp.eq.s32.totalorder %s22, 0
      %p201 = por %p199, %p200
      %p202 = scmp.le.s32.totalorder 1, %s16
      %p203 = scmp.lt.s32.totalorder %s16, 3
      %p204 = pnand %p202, %p203
      %p205 = pneg %p204
      // Predicated region
      $region9: #{tpu_custom_call.1} parent=5 // pred_check
        _
      $region10: #{tpu_custom_call.1} parent=5 // pred_check_branch
        %207 = sbr.rel (%p204) target = $region12
      $region11: #{tpu_custom_call.1} parent=5 // pred_region
        %s208 = ssub.s32 %s16, 1
        // Predicated region
        $region13: #{tpu_custom_call.1} parent=11 // pred_check
          %p209 = pneg %p63
        $region14: #{tpu_custom_call.1} parent=11 // pred_check_branch
          %211 = sbr.rel (%p209) target = $region16
        $region15: #{tpu_custom_call.1} parent=11 // pred_region
          _
        $region16: #{tpu_custom_call.1} parent=11 // pred_fallthru
          _
        // Predicated region
        $region17: #{tpu_custom_call.1} parent=11 // pred_check
          %p212 = pneg %p84
        $region18: #{tpu_custom_call.1} parent=11 // pred_check_branch
          %214 = sbr.rel (%p212) target = $region20
        $region19: #{tpu_custom_call.1} parent=11 // pred_region
          _
        $region20: #{tpu_custom_call.1} parent=11 // pred_fallthru
          _
        // Predicated region
        $region21: #{tpu_custom_call.1} parent=11 // pred_check
          %p215 = pneg %p105
        $region22: #{tpu_custom_call.1} parent=11 // pred_check_branch
          %217 = sbr.rel (%p215) target = $region24
        $region23: #{tpu_custom_call.1} parent=11 // pred_region
          _
        $region24: #{tpu_custom_call.1} parent=11 // pred_fallthru
          _
        // Predicated region
        $region25: #{tpu_custom_call.1} parent=11 // pred_check
          %p218 = pneg %p126
        $region26: #{tpu_custom_call.1} parent=11 // pred_check_branch
          %220 = sbr.rel (%p218) target = $region28
        $region27: #{tpu_custom_call.1} parent=11 // pred_region
          _
        $region28: #{tpu_custom_call.1} parent=11 // pred_fallthru
          _
        // Predicated region
        $region29: #{tpu_custom_call.1} parent=11 // pred_check
          %p221 = pneg %p147
        $region30: #{tpu_custom_call.1} parent=11 // pred_check_branch
          %223 = sbr.rel (%p221) target = $region32
        $region31: #{tpu_custom_call.1} parent=11 // pred_region
          _
        $region32: #{tpu_custom_call.1} parent=11 // pred_fallthru
          _
        // Predicated region
        $region33: #{tpu_custom_call.1} parent=11 // pred_check
          %p224 = pneg %p168
        $region34: #{tpu_custom_call.1} parent=11 // pred_check_branch
          %226 = sbr.rel (%p224) target = $region36
        $region35: #{tpu_custom_call.1} parent=11 // pred_region
          _
        $region36: #{tpu_custom_call.1} parent=11 // pred_fallthru
          _
      $region12: #{tpu_custom_call.1} parent=5 // pred_fallthru
        _
      %p227 = scmp.lt.s32.totalorder %s16, 2
      // Predicated region
      $region37: #{tpu_custom_call.1} parent=5 // pred_check
        %p228 = pneg %p227
      $region38: #{tpu_custom_call.1} parent=5 // pred_check_branch
        %230 = sbr.rel (%p228) target = $region40
      $region39: #{tpu_custom_call.1} parent=5 // pred_region
        // Predicated region
        $region41: #{tpu_custom_call.1} parent=39 // pred_check
          %p231 = pneg %p36
        $region42: #{tpu_custom_call.1} parent=39 // pred_check_branch
          %233 = sbr.rel (%p231) target = $region44
        $region43: #{tpu_custom_call.1} parent=39 // pred_region
          %p234 = scmp.lt.s32.totalorder %s16, 1
          %s235 = scalar_select %p234, %s16, 1
          %s236 = smul.addr %s235, 2
          %s237 = smul.addr %s236, 4
          %s238 = scalar_lea.vmem %s0, %s237
        $region44: #{tpu_custom_call.1} parent=39 // pred_fallthru
          _
      $region40: #{tpu_custom_call.1} parent=5 // pred_fallthru
        _
      %p239 = scmp.le.s32.totalorder 1, %s16
      %p240 = scmp.lt.s32.totalorder %s16, 3
      %p241 = pnand %p239, %p240
      %p242 = pneg %p241
      // Predicated region
      $region45: #{tpu_custom_call.1} parent=5 // pred_check
        _
      $region46: #{tpu_custom_call.1} parent=5 // pred_check_branch
        %244 = sbr.rel (%p241) target = $region48
      $region47: #{tpu_custom_call.1} parent=5 // pred_region
        %s245 = ssub.s32 %s16, 1
        %p246 = scmp.lt.s32.totalorder %s21, 1
        %s247 = scalar_select %p246, %s21, 1
        %s248 = smul.addr %s247, 2
        %s249 = smul.addr %s248, 4
        %s250 = scalar_lea.vmem %s0, %s249
        %p251 = pneg %p42
        %p252 = pneg %p39
        %p253 = pneg %p63
        %p254 = pneg %p60
        %p255 = pneg %p84
        %p256 = pneg %p81
        %p257 = pneg %p105
        %p258 = pneg %p102
        %p259 = pneg %p126
        %p260 = pneg %p123
        %p261 = pneg %p147
        %p262 = pneg %p144
        %p263 = pneg %p168
        %p264 = pneg %p165
        %p265 = pneg %p194
        %p266 = pneg %p191
        %s267 = sand.u32 %s181, 1
        %s268 = scalar_lea.sflag [#allocation3], %s267
        %s269 = sand.u32 %s181, 1
        %s270 = smul.addr %s269, 8
        %s271 = scalar_lea.vmem [#allocation2], %s270
        %p272 = scmp.lt.s32.totalorder %s21, 1
        %s273 = scalar_select %p272, %s21, 1
        %s274 = smul.addr %s273, 2
        %s275 = smul.addr %s274, 4
        %s276 = scalar_lea.vmem %s0, %s275
        %v278 = vld [vmem:[%s1] sm:$0xff]
        %v279 = vld [vmem:[%s1 + $0x8] sm:$0xff]
        %v280 = vld [vmem:[%s1 + $0x10] sm:$0xff]
        %v281 = vld [vmem:[%s1 + $0x18] sm:$0xff]
        %v282 = vld [vmem:[%s1 + $0x20] sm:$0xff]
        %v283 = vld [vmem:[%s1 + $0x28] sm:$0xff]
        %v284 = vld [vmem:[%s1 + $0x30] sm:$0xff]
        %v285 = vld [vmem:[%s1 + $0x38] sm:$0xff]
        %v286 = vld [vmem:[%s1 + $0x40] sm:$0xff]
        %v287 = vld [vmem:[%s1 + $0x48] sm:$0xff]
        %v288 = vld [vmem:[%s1 + $0x50] sm:$0xff]
        %v289 = vld [vmem:[%s1 + $0x58] sm:$0xff]
        %v290 = vld [vmem:[%s1 + $0x60] sm:$0xff]
        %v291 = vld [vmem:[%s1 + $0x68] sm:$0xff]
        %v292 = vld [vmem:[%s1 + $0x70] sm:$0xff]
        %v293 = vld [vmem:[%s1 + $0x78] sm:$0xff]
        %v294 = vld [vmem:[%s2] sm:$0xff]
        %v295 = vld [vmem:[%s2 + $0x8] sm:$0xff]
        %v296 = vld [vmem:[%s2 + $0x10] sm:$0xff]
        %v297 = vld [vmem:[%s2 + $0x18] sm:$0xff]
        %v298 = vld [vmem:[%s2 + $0x20] sm:$0xff]
        %v299 = vld [vmem:[%s2 + $0x28] sm:$0xff]
        %v300 = vld [vmem:[%s2 + $0x30] sm:$0xff]
        %v301 = vld [vmem:[%s2 + $0x38] sm:$0xff]
        %v302 = vld [vmem:[%s2 + $0x40] sm:$0xff]
        %v303 = vld [vmem:[%s2 + $0x48] sm:$0xff]
        %v304 = vld [vmem:[%s2 + $0x50] sm:$0xff]
        %v305 = vld [vmem:[%s2 + $0x58] sm:$0xff]
        %v306 = vld [vmem:[%s2 + $0x60] sm:$0xff]
        %v307 = vld [vmem:[%s2 + $0x68] sm:$0xff]
        %v308 = vld [vmem:[%s2 + $0x70] sm:$0xff]
        %v309 = vld [vmem:[%s2 + $0x78] sm:$0xff]
        %v310 = vld [vmem:[%s3] sm:$0xf]
        %v311 = vld [vmem:[%s3 + $0x4] sm:$0xf]
        %v312 = vld [vmem:[%s3 + $0x8] sm:$0xf]
        %v313 = vld [vmem:[%s3 + $0xc] sm:$0xf]
        %v314 = vld [vmem:[%s3 + $0x10] sm:$0xf]
        %v315 = vld [vmem:[%s3 + $0x14] sm:$0xf]
        %v316 = vld [vmem:[%s3 + $0x18] sm:$0xf]
        %v317 = vld [vmem:[%s3 + $0x1c] sm:$0xf]
        %v318 = vld [vmem:[%s3 + $0x20] sm:$0xf]
        %v319 = vld [vmem:[%s3 + $0x24] sm:$0xf]
        %v320 = vld [vmem:[%s3 + $0x28] sm:$0xf]
        %v321 = vld [vmem:[%s3 + $0x2c] sm:$0xf]
        %v322 = vld [vmem:[%s3 + $0x30] sm:$0xf]
        %v323 = vld [vmem:[%s3 + $0x34] sm:$0xf]
        %v324 = vld [vmem:[%s3 + $0x38] sm:$0xf]
        %v325 = vld [vmem:[%s3 + $0x3c] sm:$0xf]
        %v326 = vld [vmem:[%s4] sm:$0x3]
        %v327 = vld [vmem:[%s5] sm:$0xf]
        %v328 = vld [vmem:[%s5 + $0x4] sm:$0xf]
        %v329 = vld [vmem:[%s5 + $0x8] sm:$0xf]
        %v330 = vld [vmem:[%s5 + $0xc] sm:$0xf]
        %v331 = vld [vmem:[%s5 + $0x10] sm:$0xf]
        %v332 = vld [vmem:[%s5 + $0x14] sm:$0xf]
        %v333 = vld [vmem:[%s5 + $0x18] sm:$0xf]
        %v334 = vld [vmem:[%s5 + $0x1c] sm:$0xf]
        %v335 = vld [vmem:[%s5 + $0x20] sm:$0xf]
        %v336 = vld [vmem:[%s5 + $0x24] sm:$0xf]
        %v337 = vld [vmem:[%s5 + $0x28] sm:$0xf]
        %v338 = vld [vmem:[%s5 + $0x2c] sm:$0xf]
        %v339 = vld [vmem:[%s5 + $0x30] sm:$0xf]
        %v340 = vld [vmem:[%s5 + $0x34] sm:$0xf]
        %v341 = vld [vmem:[%s5 + $0x38] sm:$0xf]
        %v342 = vld [vmem:[%s5 + $0x3c] sm:$0xf]
        %v343 = vld [vmem:[%s6] sm:$0xf]
        %v344 = vld [vmem:[%s276] sm:$0xff]
        %346 = vset.pattern.permute.xlu0 0
        %347 = vperm.xlu0 %346, %v278
        %v348 = vpop.permute.xlu0 %347
        %351 = vset.pattern.permute.xlu0 0
        %352 = vperm.xlu0 %351, %v279
        %v353 = vpop.permute.xlu0 %352
        %356 = vset.pattern.permute.xlu0 0
        %357 = vperm.xlu0 %356, %v280
        %v358 = vpop.permute.xlu0 %357
        %361 = vset.pattern.permute.xlu0 0
        %362 = vperm.xlu0 %361, %v281
        %v363 = vpop.permute.xlu0 %362
        %366 = vset.pattern.permute.xlu0 0
        %367 = vperm.xlu0 %366, %v282
        %v368 = vpop.permute.xlu0 %367
        %371 = vset.pattern.permute.xlu0 0
        %372 = vperm.xlu0 %371, %v283
        %v373 = vpop.permute.xlu0 %372
        %376 = vset.pattern.permute.xlu0 0
        %377 = vperm.xlu0 %376, %v284
        %v378 = vpop.permute.xlu0 %377
        %381 = vset.pattern.permute.xlu0 0
        %382 = vperm.xlu0 %381, %v285
        %v383 = vpop.permute.xlu0 %382
        %386 = vset.pattern.permute.xlu0 0
        %387 = vperm.xlu0 %386, %v286
        %v388 = vpop.permute.xlu0 %387
        %391 = vset.pattern.permute.xlu0 0
        %392 = vperm.xlu0 %391, %v287
        %v393 = vpop.permute.xlu0 %392
        %396 = vset.pattern.permute.xlu0 0
        %397 = vperm.xlu0 %396, %v288
        %v398 = vpop.permute.xlu0 %397
        %401 = vset.pattern.permute.xlu0 0
        %402 = vperm.xlu0 %401, %v289
        %v403 = vpop.permute.xlu0 %402
        %406 = vset.pattern.permute.xlu0 0
        %407 = vperm.xlu0 %406, %v290
        %v408 = vpop.permute.xlu0 %407
        %411 = vset.pattern.permute.xlu0 0
        %412 = vperm.xlu0 %411, %v291
        %v413 = vpop.permute.xlu0 %412
        %416 = vset.pattern.permute.xlu0 0
        %417 = vperm.xlu0 %416, %v292
        %v418 = vpop.permute.xlu0 %417
        %421 = vset.pattern.permute.xlu0 0
        %422 = vperm.xlu0 %421, %v293
        %v423 = vpop.permute.xlu0 %422
        %v426 = vlaneseq
        %v427 = vshrl.u32 %v426, 7
        %v428 = vsub.s32 0, %v427
        %v429 = vrot.slane %v344, %v428
        %v430 = vlaneseq
        %v431 = vshrl.u32 %v430, 7
        %v432 = vsub.s32 4, %v431
        %v433 = vrot.slane %v344, %v432
        %v436 = vlaneseq
        %v437 = vshrl.u32 %v436, 7
        %v438 = vsub.s32 0, %v437
        %v439 = vrot.slane %v429, %v438
        %v440 = vlaneseq
        %v441 = vshrl.u32 %v440, 7
        %v442 = vsub.s32 0, %v441
        %v443 = vrot.slane %v433, %v442
        %v444 = vmul.f32 %v348, %v439
        %v445 = vmul.f32 %v348, %v443
        %v446 = vmul.f32 %v353, %v439
        %v447 = vmul.f32 %v353, %v443
        %v448 = vmul.f32 %v358, %v439
        %v449 = vmul.f32 %v358, %v443
        %v450 = vmul.f32 %v363, %v439
        %v451 = vmul.f32 %v363, %v443
        %v452 = vmul.f32 %v368, %v439
        %v453 = vmul.f32 %v368, %v443
        %v454 = vmul.f32 %v373, %v439
        %v455 = vmul.f32 %v373, %v443
        %v456 = vmul.f32 %v378, %v439
        %v457 = vmul.f32 %v378, %v443
        %v458 = vmul.f32 %v383, %v439
        %v459 = vmul.f32 %v383, %v443
        %v460 = vmul.f32 %v388, %v439
        %v461 = vmul.f32 %v388, %v443
        %v462 = vmul.f32 %v393, %v439
        %v463 = vmul.f32 %v393, %v443
        %v464 = vmul.f32 %v398, %v439
        %v465 = vmul.f32 %v398, %v443
        %v466 = vmul.f32 %v403, %v439
        %v467 = vmul.f32 %v403, %v443
        %v468 = vmul.f32 %v408, %v439
        %v469 = vmul.f32 %v408, %v443
        %v470 = vmul.f32 %v413, %v439
        %v471 = vmul.f32 %v413, %v443
        %v472 = vmul.f32 %v418, %v439
        %v473 = vmul.f32 %v418, %v443
        %v474 = vmul.f32 %v423, %v439
        %v475 = vmul.f32 %v423, %v443
        %477 = vset.pattern.permute.xlu0 0
        %478 = vperm.xlu0 %477, %v294
        %v479 = vpop.permute.xlu0 %478
        %482 = vset.pattern.permute.xlu0 0
        %483 = vperm.xlu0 %482, %v295
        %v484 = vpop.permute.xlu0 %483
        %487 = vset.pattern.permute.xlu0 0
        %488 = vperm.xlu0 %487, %v296
        %v489 = vpop.permute.xlu0 %488
        %492 = vset.pattern.permute.xlu0 0
        %493 = vperm.xlu0 %492, %v297
        %v494 = vpop.permute.xlu0 %493
        %497 = vset.pattern.permute.xlu0 0
        %498 = vperm.xlu0 %497, %v298
        %v499 = vpop.permute.xlu0 %498
        %502 = vset.pattern.permute.xlu0 0
        %503 = vperm.xlu0 %502, %v299
        %v504 = vpop.permute.xlu0 %503
        %507 = vset.pattern.permute.xlu0 0
        %508 = vperm.xlu0 %507, %v300
        %v509 = vpop.permute.xlu0 %508
        %512 = vset.pattern.permute.xlu0 0
        %513 = vperm.xlu0 %512, %v301
        %v514 = vpop.permute.xlu0 %513
        %517 = vset.pattern.permute.xlu0 0
        %518 = vperm.xlu0 %517, %v302
        %v519 = vpop.permute.xlu0 %518
        %522 = vset.pattern.permute.xlu0 0
        %523 = vperm.xlu0 %522, %v303
        %v524 = vpop.permute.xlu0 %523
        %527 = vset.pattern.permute.xlu0 0
        %528 = vperm.xlu0 %527, %v304
        %v529 = vpop.permute.xlu0 %528
        %532 = vset.pattern.permute.xlu0 0
        %533 = vperm.xlu0 %532, %v305
        %v534 = vpop.permute.xlu0 %533
        %537 = vset.pattern.permute.xlu0 0
        %538 = vperm.xlu0 %537, %v306
        %v539 = vpop.permute.xlu0 %538
        %542 = vset.pattern.permute.xlu0 0
        %543 = vperm.xlu0 %542, %v307
        %v544 = vpop.permute.xlu0 %543
        %547 = vset.pattern.permute.xlu0 0
        %548 = vperm.xlu0 %547, %v308
        %v549 = vpop.permute.xlu0 %548
        %552 = vset.pattern.permute.xlu0 0
        %553 = vperm.xlu0 %552, %v309
        %v554 = vpop.permute.xlu0 %553
        %v556 = vmul.f32 %v479, %v439
        %v557 = vmul.f32 %v479, %v443
        %v558 = vmul.f32 %v484, %v439
        %v559 = vmul.f32 %v484, %v443
        %v560 = vmul.f32 %v489, %v439
        %v561 = vmul.f32 %v489, %v443
        %v562 = vmul.f32 %v494, %v439
        %v563 = vmul.f32 %v494, %v443
        %v564 = vmul.f32 %v499, %v439
        %v565 = vmul.f32 %v499, %v443
        %v566 = vmul.f32 %v504, %v439
        %v567 = vmul.f32 %v504, %v443
        %v568 = vmul.f32 %v509, %v439
        %v569 = vmul.f32 %v509, %v443
        %v570 = vmul.f32 %v514, %v439
        %v571 = vmul.f32 %v514, %v443
        %v572 = vmul.f32 %v519, %v439
        %v573 = vmul.f32 %v519, %v443
        %v574 = vmul.f32 %v524, %v439
        %v575 = vmul.f32 %v524, %v443
        %v576 = vmul.f32 %v529, %v439
        %v577 = vmul.f32 %v529, %v443
        %v578 = vmul.f32 %v534, %v439
        %v579 = vmul.f32 %v534, %v443
        %v580 = vmul.f32 %v539, %v439
        %v581 = vmul.f32 %v539, %v443
        %v582 = vmul.f32 %v544, %v439
        %v583 = vmul.f32 %v544, %v443
        %v584 = vmul.f32 %v549, %v439
        %v585 = vmul.f32 %v549, %v443
        %v586 = vmul.f32 %v554, %v439
        %v587 = vmul.f32 %v554, %v443
        %588 = vset.pattern.permute.xlu0 1
        %589 = vperm.xlu0 %588, %v278
        %v590 = vpop.permute.xlu0 %589
        %592 = vset.pattern.permute.xlu0 1
        %593 = vperm.xlu0 %592, %v279
        %v594 = vpop.permute.xlu0 %593
        %596 = vset.pattern.permute.xlu0 1
        %597 = vperm.xlu0 %596, %v280
        %v598 = vpop.permute.xlu0 %597
        %600 = vset.pattern.permute.xlu0 1
        %601 = vperm.xlu0 %600, %v281
        %v602 = vpop.permute.xlu0 %601
        %604 = vset.pattern.permute.xlu0 1
        %605 = vperm.xlu0 %604, %v282
        %v606 = vpop.permute.xlu0 %605
        %608 = vset.pattern.permute.xlu0 1
        %609 = vperm.xlu0 %608, %v283
        %v610 = vpop.permute.xlu0 %609
        %612 = vset.pattern.permute.xlu0 1
        %613 = vperm.xlu0 %612, %v284
        %v614 = vpop.permute.xlu0 %613
        %616 = vset.pattern.permute.xlu0 1
        %617 = vperm.xlu0 %616, %v285
        %v618 = vpop.permute.xlu0 %617
        %620 = vset.pattern.permute.xlu0 1
        %621 = vperm.xlu0 %620, %v286
        %v622 = vpop.permute.xlu0 %621
        %624 = vset.pattern.permute.xlu0 1
        %625 = vperm.xlu0 %624, %v287
        %v626 = vpop.permute.xlu0 %625
        %628 = vset.pattern.permute.xlu0 1
        %629 = vperm.xlu0 %628, %v288
        %v630 = vpop.permute.xlu0 %629
        %632 = vset.pattern.permute.xlu0 1
        %633 = vperm.xlu0 %632, %v289
        %v634 = vpop.permute.xlu0 %633
        %636 = vset.pattern.permute.xlu0 1
        %637 = vperm.xlu0 %636, %v290
        %v638 = vpop.permute.xlu0 %637
        %640 = vset.pattern.permute.xlu0 1
        %641 = vperm.xlu0 %640, %v291
        %v642 = vpop.permute.xlu0 %641
        %644 = vset.pattern.permute.xlu0 1
        %645 = vperm.xlu0 %644, %v292
        %v646 = vpop.permute.xlu0 %645
        %648 = vset.pattern.permute.xlu0 1
        %649 = vperm.xlu0 %648, %v293
        %v650 = vpop.permute.xlu0 %649
        %v652 = vlaneseq
        %v653 = vshrl.u32 %v652, 7
        %v654 = vsub.s32 1, %v653
        %v655 = vrot.slane %v344, %v654
        %v656 = vlaneseq
        %v657 = vshrl.u32 %v656, 7
        %v658 = vsub.s32 5, %v657
        %v659 = vrot.slane %v344, %v658
        %v662 = vlaneseq
        %v663 = vshrl.u32 %v662, 7
        %v664 = vsub.s32 1, %v663
        %v665 = vrot.slane %v655, %v664
        %v666 = vlaneseq
        %v667 = vshrl.u32 %v666, 7
        %v668 = vsub.s32 1, %v667
        %v669 = vrot.slane %v659, %v668
        %v670 = vmul.f32 %v590, %v665
        %v671 = vmul.f32 %v590, %v669
        %v672 = vmul.f32 %v594, %v665
        %v673 = vmul.f32 %v594, %v669
        %v674 = vmul.f32 %v598, %v665
        %v675 = vmul.f32 %v598, %v669
        %v676 = vmul.f32 %v602, %v665
        %v677 = vmul.f32 %v602, %v669
        %v678 = vmul.f32 %v606, %v665
        %v679 = vmul.f32 %v606, %v669
        %v680 = vmul.f32 %v610, %v665
        %v681 = vmul.f32 %v610, %v669
        %v682 = vmul.f32 %v614, %v665
        %v683 = vmul.f32 %v614, %v669
        %v684 = vmul.f32 %v618, %v665
        %v685 = vmul.f32 %v618, %v669
        %v686 = vmul.f32 %v622, %v665
        %v687 = vmul.f32 %v622, %v669
        %v688 = vmul.f32 %v626, %v665
        %v689 = vmul.f32 %v626, %v669
        %v690 = vmul.f32 %v630, %v665
        %v691 = vmul.f32 %v630, %v669
        %v692 = vmul.f32 %v634, %v665
        %v693 = vmul.f32 %v634, %v669
        %v694 = vmul.f32 %v638, %v665
        %v695 = vmul.f32 %v638, %v669
        %v696 = vmul.f32 %v642, %v665
        %v697 = vmul.f32 %v642, %v669
        %v698 = vmul.f32 %v646, %v665
        %v699 = vmul.f32 %v646, %v669
        %v700 = vmul.f32 %v650, %v665
        %v701 = vmul.f32 %v650, %v669
        %v702 = vadd.f32 %v444, %v670
        %v703 = vadd.f32 %v445, %v671
        %v704 = vadd.f32 %v446, %v672
        %v705 = vadd.f32 %v447, %v673
        %v706 = vadd.f32 %v448, %v674
        %v707 = vadd.f32 %v449, %v675
        %v708 = vadd.f32 %v450, %v676
        %v709 = vadd.f32 %v451, %v677
        %v710 = vadd.f32 %v452, %v678
        %v711 = vadd.f32 %v453, %v679
        %v712 = vadd.f32 %v454, %v680
        %v713 = vadd.f32 %v455, %v681
        %v714 = vadd.f32 %v456, %v682
        %v715 = vadd.f32 %v457, %v683
        %v716 = vadd.f32 %v458, %v684
        %v717 = vadd.f32 %v459, %v685
        %v718 = vadd.f32 %v460, %v686
        %v719 = vadd.f32 %v461, %v687
        %v720 = vadd.f32 %v462, %v688
        %v721 = vadd.f32 %v463, %v689
        %v722 = vadd.f32 %v464, %v690
        %v723 = vadd.f32 %v465, %v691
        %v724 = vadd.f32 %v466, %v692
        %v725 = vadd.f32 %v467, %v693
        %v726 = vadd.f32 %v468, %v694
        %v727 = vadd.f32 %v469, %v695
        %v728 = vadd.f32 %v470, %v696
        %v729 = vadd.f32 %v471, %v697
        %v730 = vadd.f32 %v472, %v698
        %v731 = vadd.f32 %v473, %v699
        %v732 = vadd.f32 %v474, %v700
        %v733 = vadd.f32 %v475, %v701
        %734 = vset.pattern.permute.xlu0 1
        %735 = vperm.xlu0 %734, %v294
        %v736 = vpop.permute.xlu0 %735
        %738 = vset.pattern.permute.xlu0 1
        %739 = vperm.xlu0 %738, %v295
        %v740 = vpop.permute.xlu0 %739
        %742 = vset.pattern.permute.xlu0 1
        %743 = vperm.xlu0 %742, %v296
        %v744 = vpop.permute.xlu0 %743
        %746 = vset.pattern.permute.xlu0 1
        %747 = vperm.xlu0 %746, %v297
        %v748 = vpop.permute.xlu0 %747
        %750 = vset.pattern.permute.xlu0 1
        %751 = vperm.xlu0 %750, %v298
        %v752 = vpop.permute.xlu0 %751
        %754 = vset.pattern.permute.xlu0 1
        %755 = vperm.xlu0 %754, %v299
        %v756 = vpop.permute.xlu0 %755
        %758 = vset.pattern.permute.xlu0 1
        %759 = vperm.xlu0 %758, %v300
        %v760 = vpop.permute.xlu0 %759
        %762 = vset.pattern.permute.xlu0 1
        %763 = vperm.xlu0 %762, %v301
        %v764 = vpop.permute.xlu0 %763
        %766 = vset.pattern.permute.xlu0 1
        %767 = vperm.xlu0 %766, %v302
        %v768 = vpop.permute.xlu0 %767
        %770 = vset.pattern.permute.xlu0 1
        %771 = vperm.xlu0 %770, %v303
        %v772 = vpop.permute.xlu0 %771
        %774 = vset.pattern.permute.xlu0 1
        %775 = vperm.xlu0 %774, %v304
        %v776 = vpop.permute.xlu0 %775
        %778 = vset.pattern.permute.xlu0 1
        %779 = vperm.xlu0 %778, %v305
        %v780 = vpop.permute.xlu0 %779
        %782 = vset.pattern.permute.xlu0 1
        %783 = vperm.xlu0 %782, %v306
        %v784 = vpop.permute.xlu0 %783
        %786 = vset.pattern.permute.xlu0 1
        %787 = vperm.xlu0 %786, %v307
        %v788 = vpop.permute.xlu0 %787
        %790 = vset.pattern.permute.xlu0 1
        %791 = vperm.xlu0 %790, %v308
        %v792 = vpop.permute.xlu0 %791
        %794 = vset.pattern.permute.xlu0 1
        %795 = vperm.xlu0 %794, %v309
        %v796 = vpop.permute.xlu0 %795
        %v798 = vmul.f32 %v736, %v665
        %v799 = vmul.f32 %v736, %v669
        %v800 = vmul.f32 %v740, %v665
        %v801 = vmul.f32 %v740, %v669
        %v802 = vmul.f32 %v744, %v665
        %v803 = vmul.f32 %v744, %v669
        %v804 = vmul.f32 %v748, %v665
        %v805 = vmul.f32 %v748, %v669
        %v806 = vmul.f32 %v752, %v665
        %v807 = vmul.f32 %v752, %v669
        %v808 = vmul.f32 %v756, %v665
        %v809 = vmul.f32 %v756, %v669
        %v810 = vmul.f32 %v760, %v665
        %v811 = vmul.f32 %v760, %v669
        %v812 = vmul.f32 %v764, %v665
        %v813 = vmul.f32 %v764, %v669
        %v814 = vmul.f32 %v768, %v665
        %v815 = vmul.f32 %v768, %v669
        %v816 = vmul.f32 %v772, %v665
        %v817 = vmul.f32 %v772, %v669
        %v818 = vmul.f32 %v776, %v665
        %v819 = vmul.f32 %v776, %v669
        %v820 = vmul.f32 %v780, %v665
        %v821 = vmul.f32 %v780, %v669
        %v822 = vmul.f32 %v784, %v665
        %v823 = vmul.f32 %v784, %v669
        %v824 = vmul.f32 %v788, %v665
        %v825 = vmul.f32 %v788, %v669
        %v826 = vmul.f32 %v792, %v665
        %v827 = vmul.f32 %v792, %v669
        %v828 = vmul.f32 %v796, %v665
        %v829 = vmul.f32 %v796, %v669
        %v830 = vadd.f32 %v556, %v798
        %v831 = vadd.f32 %v557, %v799
        %v832 = vadd.f32 %v558, %v800
        %v833 = vadd.f32 %v559, %v801
        %v834 = vadd.f32 %v560, %v802
        %v835 = vadd.f32 %v561, %v803
        %v836 = vadd.f32 %v562, %v804
        %v837 = vadd.f32 %v563, %v805
        %v838 = vadd.f32 %v564, %v806
        %v839 = vadd.f32 %v565, %v807
        %v840 = vadd.f32 %v566, %v808
        %v841 = vadd.f32 %v567, %v809
        %v842 = vadd.f32 %v568, %v810
        %v843 = vadd.f32 %v569, %v811
        %v844 = vadd.f32 %v570, %v812
        %v845 = vadd.f32 %v571, %v813
        %v846 = vadd.f32 %v572, %v814
        %v847 = vadd.f32 %v573, %v815
        %v848 = vadd.f32 %v574, %v816
        %v849 = vadd.f32 %v575, %v817
        %v850 = vadd.f32 %v576, %v818
        %v851 = vadd.f32 %v577, %v819
        %v852 = vadd.f32 %v578, %v820
        %v853 = vadd.f32 %v579, %v821
        %v854 = vadd.f32 %v580, %v822
        %v855 = vadd.f32 %v581, %v823
        %v856 = vadd.f32 %v582, %v824
        %v857 = vadd.f32 %v583, %v825
        %v858 = vadd.f32 %v584, %v826
        %v859 = vadd.f32 %v585, %v827
        %v860 = vadd.f32 %v586, %v828
        %v861 = vadd.f32 %v587, %v829
        %862 = vset.pattern.permute.xlu0 2
        %863 = vperm.xlu0 %862, %v278
        %v864 = vpop.permute.xlu0 %863
        %866 = vset.pattern.permute.xlu0 2
        %867 = vperm.xlu0 %866, %v279
        %v868 = vpop.permute.xlu0 %867
        %870 = vset.pattern.permute.xlu0 2
        %871 = vperm.xlu0 %870, %v280
        %v872 = vpop.permute.xlu0 %871
        %874 = vset.pattern.permute.xlu0 2
        %875 = vperm.xlu0 %874, %v281
        %v876 = vpop.permute.xlu0 %875
        %878 = vset.pattern.permute.xlu0 2
        %879 = vperm.xlu0 %878, %v282
        %v880 = vpop.permute.xlu0 %879
        %882 = vset.pattern.permute.xlu0 2
        %883 = vperm.xlu0 %882, %v283
        %v884 = vpop.permute.xlu0 %883
        %886 = vset.pattern.permute.xlu0 2
        %887 = vperm.xlu0 %886, %v284
        %v888 = vpop.permute.xlu0 %887
        %890 = vset.pattern.permute.xlu0 2
        %891 = vperm.xlu0 %890, %v285
        %v892 = vpop.permute.xlu0 %891
        %894 = vset.pattern.permute.xlu0 2
        %895 = vperm.xlu0 %894, %v286
        %v896 = vpop.permute.xlu0 %895
        %898 = vset.pattern.permute.xlu0 2
        %899 = vperm.xlu0 %898, %v287
        %v900 = vpop.permute.xlu0 %899
        %902 = vset.pattern.permute.xlu0 2
        %903 = vperm.xlu0 %902, %v288
        %v904 = vpop.permute.xlu0 %903
        %906 = vset.pattern.permute.xlu0 2
        %907 = vperm.xlu0 %906, %v289
        %v908 = vpop.permute.xlu0 %907
        %910 = vset.pattern.permute.xlu0 2
        %911 = vperm.xlu0 %910, %v290
        %v912 = vpop.permute.xlu0 %911
        %914 = vset.pattern.permute.xlu0 2
        %915 = vperm.xlu0 %914, %v291
        %v916 = vpop.permute.xlu0 %915
        %918 = vset.pattern.permute.xlu0 2
        %919 = vperm.xlu0 %918, %v292
        %v920 = vpop.permute.xlu0 %919
        %922 = vset.pattern.permute.xlu0 2
        %923 = vperm.xlu0 %922, %v293
        %v924 = vpop.permute.xlu0 %923
        %v926 = vlaneseq
        %v927 = vshrl.u32 %v926, 7
        %v928 = vsub.s32 2, %v927
        %v929 = vrot.slane %v344, %v928
        %v930 = vlaneseq
        %v931 = vshrl.u32 %v930, 7
        %v932 = vsub.s32 6, %v931
        %v933 = vrot.slane %v344, %v932
        %v936 = vlaneseq
        %v937 = vshrl.u32 %v936, 7
        %v938 = vsub.s32 2, %v937
        %v939 = vrot.slane %v929, %v938
        %v940 = vlaneseq
        %v941 = vshrl.u32 %v940, 7
        %v942 = vsub.s32 2, %v941
        %v943 = vrot.slane %v933, %v942
        %v944 = vmul.f32 %v864, %v939
        %v945 = vmul.f32 %v864, %v943
        %v946 = vmul.f32 %v868, %v939
        %v947 = vmul.f32 %v868, %v943
        %v948 = vmul.f32 %v872, %v939
        %v949 = vmul.f32 %v872, %v943
        %v950 = vmul.f32 %v876, %v939
        %v951 = vmul.f32 %v876, %v943
        %v952 = vmul.f32 %v880, %v939
        %v953 = vmul.f32 %v880, %v943
        %v954 = vmul.f32 %v884, %v939
        %v955 = vmul.f32 %v884, %v943
        %v956 = vmul.f32 %v888, %v939
        %v957 = vmul.f32 %v888, %v943
        %v958 = vmul.f32 %v892, %v939
        %v959 = vmul.f32 %v892, %v943
        %v960 = vmul.f32 %v896, %v939
        %v961 = vmul.f32 %v896, %v943
        %v962 = vmul.f32 %v900, %v939
        %v963 = vmul.f32 %v900, %v943
        %v964 = vmul.f32 %v904, %v939
        %v965 = vmul.f32 %v904, %v943
        %v966 = vmul.f32 %v908, %v939
        %v967 = vmul.f32 %v908, %v943
        %v968 = vmul.f32 %v912, %v939
        %v969 = vmul.f32 %v912, %v943
        %v970 = vmul.f32 %v916, %v939
        %v971 = vmul.f32 %v916, %v943
        %v972 = vmul.f32 %v920, %v939
        %v973 = vmul.f32 %v920, %v943
        %v974 = vmul.f32 %v924, %v939
        %v975 = vmul.f32 %v924, %v943
        %v976 = vadd.f32 %v702, %v944
        %v977 = vadd.f32 %v703, %v945
        %v978 = vadd.f32 %v704, %v946
        %v979 = vadd.f32 %v705, %v947
        %v980 = vadd.f32 %v706, %v948
        %v981 = vadd.f32 %v707, %v949
        %v982 = vadd.f32 %v708, %v950
        %v983 = vadd.f32 %v709, %v951
        %v984 = vadd.f32 %v710, %v952
        %v985 = vadd.f32 %v711, %v953
        %v986 = vadd.f32 %v712, %v954
        %v987 = vadd.f32 %v713, %v955
        %v988 = vadd.f32 %v714, %v956
        %v989 = vadd.f32 %v715, %v957
        %v990 = vadd.f32 %v716, %v958
        %v991 = vadd.f32 %v717, %v959
        %v992 = vadd.f32 %v718, %v960
        %v993 = vadd.f32 %v719, %v961
        %v994 = vadd.f32 %v720, %v962
        %v995 = vadd.f32 %v721, %v963
        %v996 = vadd.f32 %v722, %v964
        %v997 = vadd.f32 %v723, %v965
        %v998 = vadd.f32 %v724, %v966
        %v999 = vadd.f32 %v725, %v967
        %v1000 = vadd.f32 %v726, %v968
        %v1001 = vadd.f32 %v727, %v969
        %v1002 = vadd.f32 %v728, %v970
        %v1003 = vadd.f32 %v729, %v971
        %v1004 = vadd.f32 %v730, %v972
        %v1005 = vadd.f32 %v731, %v973
        %v1006 = vadd.f32 %v732, %v974
        %v1007 = vadd.f32 %v733, %v975
        %1008 = vset.pattern.permute.xlu0 2
        %1009 = vperm.xlu0 %1008, %v294
        %v1010 = vpop.permute.xlu0 %1009
        %1012 = vset.pattern.permute.xlu0 2
        %1013 = vperm.xlu0 %1012, %v295
        %v1014 = vpop.permute.xlu0 %1013
        %1016 = vset.pattern.permute.xlu0 2
        %1017 = vperm.xlu0 %1016, %v296
        %v1018 = vpop.permute.xlu0 %1017
        %1020 = vset.pattern.permute.xlu0 2
        %1021 = vperm.xlu0 %1020, %v297
        %v1022 = vpop.permute.xlu0 %1021
        %1024 = vset.pattern.permute.xlu0 2
        %1025 = vperm.xlu0 %1024, %v298
        %v1026 = vpop.permute.xlu0 %1025
        %1028 = vset.pattern.permute.xlu0 2
        %1029 = vperm.xlu0 %1028, %v299
        %v1030 = vpop.permute.xlu0 %1029
        %1032 = vset.pattern.permute.xlu0 2
        %1033 = vperm.xlu0 %1032, %v300
        %v1034 = vpop.permute.xlu0 %1033
        %1036 = vset.pattern.permute.xlu0 2
        %1037 = vperm.xlu0 %1036, %v301
        %v1038 = vpop.permute.xlu0 %1037
        %1040 = vset.pattern.permute.xlu0 2
        %1041 = vperm.xlu0 %1040, %v302
        %v1042 = vpop.permute.xlu0 %1041
        %1044 = vset.pattern.permute.xlu0 2
        %1045 = vperm.xlu0 %1044, %v303
        %v1046 = vpop.permute.xlu0 %1045
        %1048 = vset.pattern.permute.xlu0 2
        %1049 = vperm.xlu0 %1048, %v304
        %v1050 = vpop.permute.xlu0 %1049
        %1052 = vset.pattern.permute.xlu0 2
        %1053 = vperm.xlu0 %1052, %v305
        %v1054 = vpop.permute.xlu0 %1053
        %1056 = vset.pattern.permute.xlu0 2
        %1057 = vperm.xlu0 %1056, %v306
        %v1058 = vpop.permute.xlu0 %1057
        %1060 = vset.pattern.permute.xlu0 2
        %1061 = vperm.xlu0 %1060, %v307
        %v1062 = vpop.permute.xlu0 %1061
        %1064 = vset.pattern.permute.xlu0 2
        %1065 = vperm.xlu0 %1064, %v308
        %v1066 = vpop.permute.xlu0 %1065
        %1068 = vset.pattern.permute.xlu0 2
        %1069 = vperm.xlu0 %1068, %v309
        %v1070 = vpop.permute.xlu0 %1069
        %v1072 = vmul.f32 %v1010, %v939
        %v1073 = vmul.f32 %v1010, %v943
        %v1074 = vmul.f32 %v1014, %v939
        %v1075 = vmul.f32 %v1014, %v943
        %v1076 = vmul.f32 %v1018, %v939
        %v1077 = vmul.f32 %v1018, %v943
        %v1078 = vmul.f32 %v1022, %v939
        %v1079 = vmul.f32 %v1022, %v943
        %v1080 = vmul.f32 %v1026, %v939
        %v1081 = vmul.f32 %v1026, %v943
        %v1082 = vmul.f32 %v1030, %v939
        %v1083 = vmul.f32 %v1030, %v943
        %v1084 = vmul.f32 %v1034, %v939
        %v1085 = vmul.f32 %v1034, %v943
        %v1086 = vmul.f32 %v1038, %v939
        %v1087 = vmul.f32 %v1038, %v943
        %v1088 = vmul.f32 %v1042, %v939
        %v1089 = vmul.f32 %v1042, %v943
        %v1090 = vmul.f32 %v1046, %v939
        %v1091 = vmul.f32 %v1046, %v943
        %v1092 = vmul.f32 %v1050, %v939
        %v1093 = vmul.f32 %v1050, %v943
        %v1094 = vmul.f32 %v1054, %v939
        %v1095 = vmul.f32 %v1054, %v943
        %v1096 = vmul.f32 %v1058, %v939
        %v1097 = vmul.f32 %v1058, %v943
        %v1098 = vmul.f32 %v1062, %v939
        %v1099 = vmul.f32 %v1062, %v943
        %v1100 = vmul.f32 %v1066, %v939
        %v1101 = vmul.f32 %v1066, %v943
        %v1102 = vmul.f32 %v1070, %v939
        %v1103 = vmul.f32 %v1070, %v943
        %v1104 = vadd.f32 %v830, %v1072
        %v1105 = vadd.f32 %v831, %v1073
        %v1106 = vadd.f32 %v832, %v1074
        %v1107 = vadd.f32 %v833, %v1075
        %v1108 = vadd.f32 %v834, %v1076
        %v1109 = vadd.f32 %v835, %v1077
        %v1110 = vadd.f32 %v836, %v1078
        %v1111 = vadd.f32 %v837, %v1079
        %v1112 = vadd.f32 %v838, %v1080
        %v1113 = vadd.f32 %v839, %v1081
        %v1114 = vadd.f32 %v840, %v1082
        %v1115 = vadd.f32 %v841, %v1083
        %v1116 = vadd.f32 %v842, %v1084
        %v1117 = vadd.f32 %v843, %v1085
        %v1118 = vadd.f32 %v844, %v1086
        %v1119 = vadd.f32 %v845, %v1087
        %v1120 = vadd.f32 %v846, %v1088
        %v1121 = vadd.f32 %v847, %v1089
        %v1122 = vadd.f32 %v848, %v1090
        %v1123 = vadd.f32 %v849, %v1091
        %v1124 = vadd.f32 %v850, %v1092
        %v1125 = vadd.f32 %v851, %v1093
        %v1126 = vadd.f32 %v852, %v1094
        %v1127 = vadd.f32 %v853, %v1095
        %v1128 = vadd.f32 %v854, %v1096
        %v1129 = vadd.f32 %v855, %v1097
        %v1130 = vadd.f32 %v856, %v1098
        %v1131 = vadd.f32 %v857, %v1099
        %v1132 = vadd.f32 %v858, %v1100
        %v1133 = vadd.f32 %v859, %v1101
        %v1134 = vadd.f32 %v860, %v1102
        %v1135 = vadd.f32 %v861, %v1103
        %1136 = vset.pattern.permute.xlu0 3
        %1137 = vperm.xlu0 %1136, %v278
        %v1138 = vpop.permute.xlu0 %1137
        %1140 = vset.pattern.permute.xlu0 3
        %1141 = vperm.xlu0 %1140, %v279
        %v1142 = vpop.permute.xlu0 %1141
        %1144 = vset.pattern.permute.xlu0 3
        %1145 = vperm.xlu0 %1144, %v280
        %v1146 = vpop.permute.xlu0 %1145
        %1148 = vset.pattern.permute.xlu0 3
        %1149 = vperm.xlu0 %1148, %v281
        %v1150 = vpop.permute.xlu0 %1149
        %1152 = vset.pattern.permute.xlu0 3
        %1153 = vperm.xlu0 %1152, %v282
        %v1154 = vpop.permute.xlu0 %1153
        %1156 = vset.pattern.permute.xlu0 3
        %1157 = vperm.xlu0 %1156, %v283
        %v1158 = vpop.permute.xlu0 %1157
        %1160 = vset.pattern.permute.xlu0 3
        %1161 = vperm.xlu0 %1160, %v284
        %v1162 = vpop.permute.xlu0 %1161
        %1164 = vset.pattern.permute.xlu0 3
        %1165 = vperm.xlu0 %1164, %v285
        %v1166 = vpop.permute.xlu0 %1165
        %1168 = vset.pattern.permute.xlu0 3
        %1169 = vperm.xlu0 %1168, %v286
        %v1170 = vpop.permute.xlu0 %1169
        %1172 = vset.pattern.permute.xlu0 3
        %1173 = vperm.xlu0 %1172, %v287
        %v1174 = vpop.permute.xlu0 %1173
        %1176 = vset.pattern.permute.xlu0 3
        %1177 = vperm.xlu0 %1176, %v288
        %v1178 = vpop.permute.xlu0 %1177
        %1180 = vset.pattern.permute.xlu0 3
        %1181 = vperm.xlu0 %1180, %v289
        %v1182 = vpop.permute.xlu0 %1181
        %1184 = vset.pattern.permute.xlu0 3
        %1185 = vperm.xlu0 %1184, %v290
        %v1186 = vpop.permute.xlu0 %1185
        %1188 = vset.pattern.permute.xlu0 3
        %1189 = vperm.xlu0 %1188, %v291
        %v1190 = vpop.permute.xlu0 %1189
        %1192 = vset.pattern.permute.xlu0 3
        %1193 = vperm.xlu0 %1192, %v292
        %v1194 = vpop.permute.xlu0 %1193
        %1196 = vset.pattern.permute.xlu0 3
        %1197 = vperm.xlu0 %1196, %v293
        %v1198 = vpop.permute.xlu0 %1197
        %v1200 = vlaneseq
        %v1201 = vshrl.u32 %v1200, 7
        %v1202 = vsub.s32 3, %v1201
        %v1203 = vrot.slane %v344, %v1202
        %v1204 = vlaneseq
        %v1205 = vshrl.u32 %v1204, 7
        %v1206 = vsub.s32 7, %v1205
        %v1207 = vrot.slane %v344, %v1206
        %v1210 = vlaneseq
        %v1211 = vshrl.u32 %v1210, 7
        %v1212 = vsub.s32 3, %v1211
        %v1213 = vrot.slane %v1203, %v1212
        %v1214 = vlaneseq
        %v1215 = vshrl.u32 %v1214, 7
        %v1216 = vsub.s32 3, %v1215
        %v1217 = vrot.slane %v1207, %v1216
        %v1218 = vmul.f32 %v1138, %v1213
        %v1219 = vmul.f32 %v1138, %v1217
        %v1220 = vmul.f32 %v1142, %v1213
        %v1221 = vmul.f32 %v1142, %v1217
        %v1222 = vmul.f32 %v1146, %v1213
        %v1223 = vmul.f32 %v1146, %v1217
        %v1224 = vmul.f32 %v1150, %v1213
        %v1225 = vmul.f32 %v1150, %v1217
        %v1226 = vmul.f32 %v1154, %v1213
        %v1227 = vmul.f32 %v1154, %v1217
        %v1228 = vmul.f32 %v1158, %v1213
        %v1229 = vmul.f32 %v1158, %v1217
        %v1230 = vmul.f32 %v1162, %v1213
        %v1231 = vmul.f32 %v1162, %v1217
        %v1232 = vmul.f32 %v1166, %v1213
        %v1233 = vmul.f32 %v1166, %v1217
        %v1234 = vmul.f32 %v1170, %v1213
        %v1235 = vmul.f32 %v1170, %v1217
        %v1236 = vmul.f32 %v1174, %v1213
        %v1237 = vmul.f32 %v1174, %v1217
        %v1238 = vmul.f32 %v1178, %v1213
        %v1239 = vmul.f32 %v1178, %v1217
        %v1240 = vmul.f32 %v1182, %v1213
        %v1241 = vmul.f32 %v1182, %v1217
        %v1242 = vmul.f32 %v1186, %v1213
        %v1243 = vmul.f32 %v1186, %v1217
        %v1244 = vmul.f32 %v1190, %v1213
        %v1245 = vmul.f32 %v1190, %v1217
        %v1246 = vmul.f32 %v1194, %v1213
        %v1247 = vmul.f32 %v1194, %v1217
        %v1248 = vmul.f32 %v1198, %v1213
        %v1249 = vmul.f32 %v1198, %v1217
        %v1250 = vadd.f32 %v976, %v1218
        %v1251 = vadd.f32 %v977, %v1219
        %v1252 = vadd.f32 %v978, %v1220
        %v1253 = vadd.f32 %v979, %v1221
        %v1254 = vadd.f32 %v980, %v1222
        %v1255 = vadd.f32 %v981, %v1223
        %v1256 = vadd.f32 %v982, %v1224
        %v1257 = vadd.f32 %v983, %v1225
        %v1258 = vadd.f32 %v984, %v1226
        %v1259 = vadd.f32 %v985, %v1227
        %v1260 = vadd.f32 %v986, %v1228
        %v1261 = vadd.f32 %v987, %v1229
        %v1262 = vadd.f32 %v988, %v1230
        %v1263 = vadd.f32 %v989, %v1231
        %v1264 = vadd.f32 %v990, %v1232
        %v1265 = vadd.f32 %v991, %v1233
        %v1266 = vadd.f32 %v992, %v1234
        %v1267 = vadd.f32 %v993, %v1235
        %v1268 = vadd.f32 %v994, %v1236
        %v1269 = vadd.f32 %v995, %v1237
        %v1270 = vadd.f32 %v996, %v1238
        %v1271 = vadd.f32 %v997, %v1239
        %v1272 = vadd.f32 %v998, %v1240
        %v1273 = vadd.f32 %v999, %v1241
        %v1274 = vadd.f32 %v1000, %v1242
        %v1275 = vadd.f32 %v1001, %v1243
        %v1276 = vadd.f32 %v1002, %v1244
        %v1277 = vadd.f32 %v1003, %v1245
        %v1278 = vadd.f32 %v1004, %v1246
        %v1279 = vadd.f32 %v1005, %v1247
        %v1280 = vadd.f32 %v1006, %v1248
        %v1281 = vadd.f32 %v1007, %v1249
        %1282 = vset.pattern.permute.xlu0 3
        %1283 = vperm.xlu0 %1282, %v294
        %v1284 = vpop.permute.xlu0 %1283
        %1286 = vset.pattern.permute.xlu0 3
        %1287 = vperm.xlu0 %1286, %v295
        %v1288 = vpop.permute.xlu0 %1287
        %1290 = vset.pattern.permute.xlu0 3
        %1291 = vperm.xlu0 %1290, %v296
        %v1292 = vpop.permute.xlu0 %1291
        %1294 = vset.pattern.permute.xlu0 3
        %1295 = vperm.xlu0 %1294, %v297
        %v1296 = vpop.permute.xlu0 %1295
        %1298 = vset.pattern.permute.xlu0 3
        %1299 = vperm.xlu0 %1298, %v298
        %v1300 = vpop.permute.xlu0 %1299
        %1302 = vset.pattern.permute.xlu0 3
        %1303 = vperm.xlu0 %1302, %v299
        %v1304 = vpop.permute.xlu0 %1303
        %1306 = vset.pattern.permute.xlu0 3
        %1307 = vperm.xlu0 %1306, %v300
        %v1308 = vpop.permute.xlu0 %1307
        %1310 = vset.pattern.permute.xlu0 3
        %1311 = vperm.xlu0 %1310, %v301
        %v1312 = vpop.permute.xlu0 %1311
        %1314 = vset.pattern.permute.xlu0 3
        %1315 = vperm.xlu0 %1314, %v302
        %v1316 = vpop.permute.xlu0 %1315
        %1318 = vset.pattern.permute.xlu0 3
        %1319 = vperm.xlu0 %1318, %v303
        %v1320 = vpop.permute.xlu0 %1319
        %1322 = vset.pattern.permute.xlu0 3
        %1323 = vperm.xlu0 %1322, %v304
        %v1324 = vpop.permute.xlu0 %1323
        %1326 = vset.pattern.permute.xlu0 3
        %1327 = vperm.xlu0 %1326, %v305
        %v1328 = vpop.permute.xlu0 %1327
        %1330 = vset.pattern.permute.xlu0 3
        %1331 = vperm.xlu0 %1330, %v306
        %v1332 = vpop.permute.xlu0 %1331
        %1334 = vset.pattern.permute.xlu0 3
        %1335 = vperm.xlu0 %1334, %v307
        %v1336 = vpop.permute.xlu0 %1335
        %1338 = vset.pattern.permute.xlu0 3
        %1339 = vperm.xlu0 %1338, %v308
        %v1340 = vpop.permute.xlu0 %1339
        %1342 = vset.pattern.permute.xlu0 3
        %1343 = vperm.xlu0 %1342, %v309
        %v1344 = vpop.permute.xlu0 %1343
        %v1346 = vmul.f32 %v1284, %v1213
        %v1347 = vmul.f32 %v1284, %v1217
        %v1348 = vmul.f32 %v1288, %v1213
        %v1349 = vmul.f32 %v1288, %v1217
        %v1350 = vmul.f32 %v1292, %v1213
        %v1351 = vmul.f32 %v1292, %v1217
        %v1352 = vmul.f32 %v1296, %v1213
        %v1353 = vmul.f32 %v1296, %v1217
        %v1354 = vmul.f32 %v1300, %v1213
        %v1355 = vmul.f32 %v1300, %v1217
        %v1356 = vmul.f32 %v1304, %v1213
        %v1357 = vmul.f32 %v1304, %v1217
        %v1358 = vmul.f32 %v1308, %v1213
        %v1359 = vmul.f32 %v1308, %v1217
        %v1360 = vmul.f32 %v1312, %v1213
        %v1361 = vmul.f32 %v1312, %v1217
        %v1362 = vmul.f32 %v1316, %v1213
        %v1363 = vmul.f32 %v1316, %v1217
        %v1364 = vmul.f32 %v1320, %v1213
        %v1365 = vmul.f32 %v1320, %v1217
        %v1366 = vmul.f32 %v1324, %v1213
        %v1367 = vmul.f32 %v1324, %v1217
        %v1368 = vmul.f32 %v1328, %v1213
        %v1369 = vmul.f32 %v1328, %v1217
        %v1370 = vmul.f32 %v1332, %v1213
        %v1371 = vmul.f32 %v1332, %v1217
        %v1372 = vmul.f32 %v1336, %v1213
        %v1373 = vmul.f32 %v1336, %v1217
        %v1374 = vmul.f32 %v1340, %v1213
        %v1375 = vmul.f32 %v1340, %v1217
        %v1376 = vmul.f32 %v1344, %v1213
        %v1377 = vmul.f32 %v1344, %v1217
        %v1378 = vadd.f32 %v1104, %v1346
        %v1379 = vadd.f32 %v1105, %v1347
        %v1380 = vadd.f32 %v1106, %v1348
        %v1381 = vadd.f32 %v1107, %v1349
        %v1382 = vadd.f32 %v1108, %v1350
        %v1383 = vadd.f32 %v1109, %v1351
        %v1384 = vadd.f32 %v1110, %v1352
        %v1385 = vadd.f32 %v1111, %v1353
        %v1386 = vadd.f32 %v1112, %v1354
        %v1387 = vadd.f32 %v1113, %v1355
        %v1388 = vadd.f32 %v1114, %v1356
        %v1389 = vadd.f32 %v1115, %v1357
        %v1390 = vadd.f32 %v1116, %v1358
        %v1391 = vadd.f32 %v1117, %v1359
        %v1392 = vadd.f32 %v1118, %v1360
        %v1393 = vadd.f32 %v1119, %v1361
        %v1394 = vadd.f32 %v1120, %v1362
        %v1395 = vadd.f32 %v1121, %v1363
        %v1396 = vadd.f32 %v1122, %v1364
        %v1397 = vadd.f32 %v1123, %v1365
        %v1398 = vadd.f32 %v1124, %v1366
        %v1399 = vadd.f32 %v1125, %v1367
        %v1400 = vadd.f32 %v1126, %v1368
        %v1401 = vadd.f32 %v1127, %v1369
        %v1402 = vadd.f32 %v1128, %v1370
        %v1403 = vadd.f32 %v1129, %v1371
        %v1404 = vadd.f32 %v1130, %v1372
        %v1405 = vadd.f32 %v1131, %v1373
        %v1406 = vadd.f32 %v1132, %v1374
        %v1407 = vadd.f32 %v1133, %v1375
        %v1408 = vadd.f32 %v1134, %v1376
        %v1409 = vadd.f32 %v1135, %v1377
        %v1410 = vmax.f32 %v1250, %v1251
        %1411 = vmax.xlane.f32.xlu0 %v1410
        %v1412 = vpop.xlane.xlu0 %1411
        %v1413 = vmax.f32 %v1252, %v1253
        %1414 = vmax.xlane.f32.xlu0 %v1413
        %v1415 = vpop.xlane.xlu0 %1414
        %v1416 = vmax.f32 %v1254, %v1255
        %1417 = vmax.xlane.f32.xlu0 %v1416
        %v1418 = vpop.xlane.xlu0 %1417
        %v1419 = vmax.f32 %v1256, %v1257
        %1420 = vmax.xlane.f32.xlu0 %v1419
        %v1421 = vpop.xlane.xlu0 %1420
        %v1422 = vmax.f32 %v1258, %v1259
        %1423 = vmax.xlane.f32.xlu0 %v1422
        %v1424 = vpop.xlane.xlu0 %1423
        %v1425 = vmax.f32 %v1260, %v1261
        %1426 = vmax.xlane.f32.xlu0 %v1425
        %v1427 = vpop.xlane.xlu0 %1426
        %v1428 = vmax.f32 %v1262, %v1263
        %1429 = vmax.xlane.f32.xlu0 %v1428
        %v1430 = vpop.xlane.xlu0 %1429
        %v1431 = vmax.f32 %v1264, %v1265
        %1432 = vmax.xlane.f32.xlu0 %v1431
        %v1433 = vpop.xlane.xlu0 %1432
        %v1434 = vmax.f32 %v1266, %v1267
        %1435 = vmax.xlane.f32.xlu0 %v1434
        %v1436 = vpop.xlane.xlu0 %1435
        %v1437 = vmax.f32 %v1268, %v1269
        %1438 = vmax.xlane.f32.xlu0 %v1437
        %v1439 = vpop.xlane.xlu0 %1438
        %v1440 = vmax.f32 %v1270, %v1271
        %1441 = vmax.xlane.f32.xlu0 %v1440
        %v1442 = vpop.xlane.xlu0 %1441
        %v1443 = vmax.f32 %v1272, %v1273
        %1444 = vmax.xlane.f32.xlu0 %v1443
        %v1445 = vpop.xlane.xlu0 %1444
        %v1446 = vmax.f32 %v1274, %v1275
        %1447 = vmax.xlane.f32.xlu0 %v1446
        %v1448 = vpop.xlane.xlu0 %1447
        %v1449 = vmax.f32 %v1276, %v1277
        %1450 = vmax.xlane.f32.xlu0 %v1449
        %v1451 = vpop.xlane.xlu0 %1450
        %v1452 = vmax.f32 %v1278, %v1279
        %1453 = vmax.xlane.f32.xlu0 %v1452
        %v1454 = vpop.xlane.xlu0 %1453
        %v1455 = vmax.f32 %v1280, %v1281
        %1456 = vmax.xlane.f32.xlu0 %v1455
        %v1457 = vpop.xlane.xlu0 %1456
        %v1458 = vsub.f32 %v1250, %v1412
        %v1459 = vsub.f32 %v1251, %v1412
        %v1460 = vsub.f32 %v1252, %v1415
        %v1461 = vsub.f32 %v1253, %v1415
        %v1462 = vsub.f32 %v1254, %v1418
        %v1463 = vsub.f32 %v1255, %v1418
        %v1464 = vsub.f32 %v1256, %v1421
        %v1465 = vsub.f32 %v1257, %v1421
        %v1466 = vsub.f32 %v1258, %v1424
        %v1467 = vsub.f32 %v1259, %v1424
        %v1468 = vsub.f32 %v1260, %v1427
        %v1469 = vsub.f32 %v1261, %v1427
        %v1470 = vsub.f32 %v1262, %v1430
        %v1471 = vsub.f32 %v1263, %v1430
        %v1472 = vsub.f32 %v1264, %v1433
        %v1473 = vsub.f32 %v1265, %v1433
        %v1474 = vsub.f32 %v1266, %v1436
        %v1475 = vsub.f32 %v1267, %v1436
        %v1476 = vsub.f32 %v1268, %v1439
        %v1477 = vsub.f32 %v1269, %v1439
        %v1478 = vsub.f32 %v1270, %v1442
        %v1479 = vsub.f32 %v1271, %v1442
        %v1480 = vsub.f32 %v1272, %v1445
        %v1481 = vsub.f32 %v1273, %v1445
        %v1482 = vsub.f32 %v1274, %v1448
        %v1483 = vsub.f32 %v1275, %v1448
        %v1484 = vsub.f32 %v1276, %v1451
        %v1485 = vsub.f32 %v1277, %v1451
        %v1486 = vsub.f32 %v1278, %v1454
        %v1487 = vsub.f32 %v1279, %v1454
        %v1488 = vsub.f32 %v1280, %v1457
        %v1489 = vsub.f32 %v1281, %v1457
        %v1490 = vmul.f32 %v1458, 1.442695
        %v1491 = vpow.pop %v1490
        %v1492 = vmul.f32 %v1459, 1.442695
        %v1493 = vpow.pop %v1492
        %v1494 = vmul.f32 %v1460, 1.442695
        %v1495 = vpow.pop %v1494
        %v1496 = vmul.f32 %v1461, 1.442695
        %v1497 = vpow.pop %v1496
        %v1498 = vmul.f32 %v1462, 1.442695
        %v1499 = vpow.pop %v1498
        %v1500 = vmul.f32 %v1463, 1.442695
        %v1501 = vpow.pop %v1500
        %v1502 = vmul.f32 %v1464, 1.442695
        %v1503 = vpow.pop %v1502
        %v1504 = vmul.f32 %v1465, 1.442695
        %v1505 = vpow.pop %v1504
        %v1506 = vmul.f32 %v1466, 1.442695
        %v1507 = vpow.pop %v1506
        %v1508 = vmul.f32 %v1467, 1.442695
        %v1509 = vpow.pop %v1508
        %v1510 = vmul.f32 %v1468, 1.442695
        %v1511 = vpow.pop %v1510
        %v1512 = vmul.f32 %v1469, 1.442695
        %v1513 = vpow.pop %v1512
        %v1514 = vmul.f32 %v1470, 1.442695
        %v1515 = vpow.pop %v1514
        %v1516 = vmul.f32 %v1471, 1.442695
        %v1517 = vpow.pop %v1516
        %v1518 = vmul.f32 %v1472, 1.442695
        %v1519 = vpow.pop %v1518
        %v1520 = vmul.f32 %v1473, 1.442695
        %v1521 = vpow.pop %v1520
        %v1522 = vmul.f32 %v1474, 1.442695
        %v1523 = vpow.pop %v1522
        %v1524 = vmul.f32 %v1475, 1.442695
        %v1525 = vpow.pop %v1524
        %v1526 = vmul.f32 %v1476, 1.442695
        %v1527 = vpow.pop %v1526
        %v1528 = vmul.f32 %v1477, 1.442695
        %v1529 = vpow.pop %v1528
        %v1530 = vmul.f32 %v1478, 1.442695
        %v1531 = vpow.pop %v1530
        %v1532 = vmul.f32 %v1479, 1.442695
        %v1533 = vpow.pop %v1532
        %v1534 = vmul.f32 %v1480, 1.442695
        %v1535 = vpow.pop %v1534
        %v1536 = vmul.f32 %v1481, 1.442695
        %v1537 = vpow.pop %v1536
        %v1538 = vmul.f32 %v1482, 1.442695
        %v1539 = vpow.pop %v1538
        %v1540 = vmul.f32 %v1483, 1.442695
        %v1541 = vpow.pop %v1540
        %v1542 = vmul.f32 %v1484, 1.442695
        %v1543 = vpow.pop %v1542
        %v1544 = vmul.f32 %v1485, 1.442695
        %v1545 = vpow.pop %v1544
        %v1546 = vmul.f32 %v1486, 1.442695
        %v1547 = vpow.pop %v1546
        %v1548 = vmul.f32 %v1487, 1.442695
        %v1549 = vpow.pop %v1548
        %v1550 = vmul.f32 %v1488, 1.442695
        %v1551 = vpow.pop %v1550
        %v1552 = vmul.f32 %v1489, 1.442695
        %v1553 = vpow.pop %v1552
        %v1554 = vadd.f32 %v1491, %v1493
        %1555 = vadd.xlane.f32.xlu0 %v1554
        %v1556 = vpop.xlane.xlu0 %1555
        %v1557 = vadd.f32 %v1495, %v1497
        %1558 = vadd.xlane.f32.xlu0 %v1557
        %v1559 = vpop.xlane.xlu0 %1558
        %v1560 = vadd.f32 %v1499, %v1501
        %1561 = vadd.xlane.f32.xlu0 %v1560
        %v1562 = vpop.xlane.xlu0 %1561
        %v1563 = vadd.f32 %v1503, %v1505
        %1564 = vadd.xlane.f32.xlu0 %v1563
        %v1565 = vpop.xlane.xlu0 %1564
        %v1566 = vadd.f32 %v1507, %v1509
        %1567 = vadd.xlane.f32.xlu0 %v1566
        %v1568 = vpop.xlane.xlu0 %1567
        %v1569 = vadd.f32 %v1511, %v1513
        %1570 = vadd.xlane.f32.xlu0 %v1569
        %v1571 = vpop.xlane.xlu0 %1570
        %v1572 = vadd.f32 %v1515, %v1517
        %1573 = vadd.xlane.f32.xlu0 %v1572
        %v1574 = vpop.xlane.xlu0 %1573
        %v1575 = vadd.f32 %v1519, %v1521
        %1576 = vadd.xlane.f32.xlu0 %v1575
        %v1577 = vpop.xlane.xlu0 %1576
        %v1578 = vadd.f32 %v1523, %v1525
        %1579 = vadd.xlane.f32.xlu0 %v1578
        %v1580 = vpop.xlane.xlu0 %1579
        %v1581 = vadd.f32 %v1527, %v1529
        %1582 = vadd.xlane.f32.xlu0 %v1581
        %v1583 = vpop.xlane.xlu0 %1582
        %v1584 = vadd.f32 %v1531, %v1533
        %1585 = vadd.xlane.f32.xlu0 %v1584
        %v1586 = vpop.xlane.xlu0 %1585
        %v1587 = vadd.f32 %v1535, %v1537
        %1588 = vadd.xlane.f32.xlu0 %v1587
        %v1589 = vpop.xlane.xlu0 %1588
        %v1590 = vadd.f32 %v1539, %v1541
        %1591 = vadd.xlane.f32.xlu0 %v1590
        %v1592 = vpop.xlane.xlu0 %1591
        %v1593 = vadd.f32 %v1543, %v1545
        %1594 = vadd.xlane.f32.xlu0 %v1593
        %v1595 = vpop.xlane.xlu0 %1594
        %v1596 = vadd.f32 %v1547, %v1549
        %1597 = vadd.xlane.f32.xlu0 %v1596
        %v1598 = vpop.xlane.xlu0 %1597
        %v1599 = vadd.f32 %v1551, %v1553
        %1600 = vadd.xlane.f32.xlu0 %v1599
        %v1601 = vpop.xlane.xlu0 %1600
        %v1602 = vrcp.pop %v1556
        %v1603 = vrcp.pop %v1559
        %v1604 = vrcp.pop %v1562
        %v1605 = vrcp.pop %v1565
        %v1606 = vrcp.pop %v1568
        %v1607 = vrcp.pop %v1571
        %v1608 = vrcp.pop %v1574
        %v1609 = vrcp.pop %v1577
        %v1610 = vrcp.pop %v1580
        %v1611 = vrcp.pop %v1583
        %v1612 = vrcp.pop %v1586
        %v1613 = vrcp.pop %v1589
        %v1614 = vrcp.pop %v1592
        %v1615 = vrcp.pop %v1595
        %v1616 = vrcp.pop %v1598
        %v1617 = vrcp.pop %v1601
        %v1618 = vmul.f32 %v1491, %v1602
        %v1619 = vmul.f32 %v1493, %v1602
        %v1620 = vmul.f32 %v1495, %v1603
        %v1621 = vmul.f32 %v1497, %v1603
        %v1622 = vmul.f32 %v1499, %v1604
        %v1623 = vmul.f32 %v1501, %v1604
        %v1624 = vmul.f32 %v1503, %v1605
        %v1625 = vmul.f32 %v1505, %v1605
        %v1626 = vmul.f32 %v1507, %v1606
        %v1627 = vmul.f32 %v1509, %v1606
        %v1628 = vmul.f32 %v1511, %v1607
        %v1629 = vmul.f32 %v1513, %v1607
        %v1630 = vmul.f32 %v1515, %v1608
        %v1631 = vmul.f32 %v1517, %v1608
        %v1632 = vmul.f32 %v1519, %v1609
        %v1633 = vmul.f32 %v1521, %v1609
        %v1634 = vmul.f32 %v1523, %v1610
        %v1635 = vmul.f32 %v1525, %v1610
        %v1636 = vmul.f32 %v1527, %v1611
        %v1637 = vmul.f32 %v1529, %v1611
        %v1638 = vmul.f32 %v1531, %v1612
        %v1639 = vmul.f32 %v1533, %v1612
        %v1640 = vmul.f32 %v1535, %v1613
        %v1641 = vmul.f32 %v1537, %v1613
        %v1642 = vmul.f32 %v1539, %v1614
        %v1643 = vmul.f32 %v1541, %v1614
        %v1644 = vmul.f32 %v1543, %v1615
        %v1645 = vmul.f32 %v1545, %v1615
        %v1646 = vmul.f32 %v1547, %v1616
        %v1647 = vmul.f32 %v1549, %v1616
        %v1648 = vmul.f32 %v1551, %v1617
        %v1649 = vmul.f32 %v1553, %v1617
        %v1650 = vpack.c.bf16 %v1620, %v1618
        %v1651 = vpack.c.bf16 %v1621, %v1619
        %v1652 = vpack.c.bf16 %v1624, %v1622
        %v1653 = vpack.c.bf16 %v1625, %v1623
        %v1654 = vpack.c.bf16 %v1628, %v1626
        %v1655 = vpack.c.bf16 %v1629, %v1627
        %v1656 = vpack.c.bf16 %v1632, %v1630
        %v1657 = vpack.c.bf16 %v1633, %v1631
        %v1658 = vpack.c.bf16 %v1636, %v1634
        %v1659 = vpack.c.bf16 %v1637, %v1635
        %v1660 = vpack.c.bf16 %v1640, %v1638
        %v1661 = vpack.c.bf16 %v1641, %v1639
        %v1662 = vpack.c.bf16 %v1644, %v1642
        %v1663 = vpack.c.bf16 %v1645, %v1643
        %v1664 = vpack.c.bf16 %v1648, %v1646
        %v1665 = vpack.c.bf16 %v1649, %v1647
        %v1666 = vpack.c.bf16 %v1380, %v1378
        %v1667 = vpack.c.bf16 %v1381, %v1379
        %v1668 = vpack.c.bf16 %v1384, %v1382
        %v1669 = vpack.c.bf16 %v1385, %v1383
        %v1670 = vpack.c.bf16 %v1388, %v1386
        %v1671 = vpack.c.bf16 %v1389, %v1387
        %v1672 = vpack.c.bf16 %v1392, %v1390
        %v1673 = vpack.c.bf16 %v1393, %v1391
        %v1674 = vpack.c.bf16 %v1396, %v1394
        %v1675 = vpack.c.bf16 %v1397, %v1395
        %v1676 = vpack.c.bf16 %v1400, %v1398
        %v1677 = vpack.c.bf16 %v1401, %v1399
        %v1678 = vpack.c.bf16 %v1404, %v1402
        %v1679 = vpack.c.bf16 %v1405, %v1403
        %v1680 = vpack.c.bf16 %v1408, %v1406
        %v1681 = vpack.c.bf16 %v1409, %v1407
        %1682 = vmatprep.subr.bf16.mxu0 %v1665
        %1683 = vmatpush1.bf16.xpose.msra.mxu0 %v1664
        %1684 = vmatprep.subr.bf16.mxu0 %v1663
        %1685 = vmatpush1.bf16.xpose.msra.mxu0 %v1662
        %1686 = vmatprep.subr.bf16.mxu0 %v1661
        %1687 = vmatpush1.bf16.xpose.msra.mxu0 %v1660
        %1688 = vmatprep.subr.bf16.mxu0 %v1659
        %1689 = vmatpush1.bf16.xpose.msra.mxu0 %v1658
        %1690 = vmatprep.subr.bf16.mxu0 %v1657
        %1691 = vmatpush1.bf16.xpose.msra.mxu0 %v1656
        %1692 = vmatprep.subr.bf16.mxu0 %v1655
        %1693 = vmatpush1.bf16.xpose.msra.mxu0 %v1654
        %1694 = vmatprep.subr.bf16.mxu0 %v1653
        %1695 = vmatpush1.bf16.xpose.msra.mxu0 %v1652
        %1696 = vmatprep.subr.bf16.mxu0 %v1651
        %1697 = vmatpush1.bf16.xpose.msra.mxu0 %v1650
        %1698 = vmatprep.subr.bf16.mxu0 0
        %1699 = vmatpush2.bf16.xpose.msra.mxu0 0
        %1700 = vmatprep.subr.bf16.mxu0 0
        %1701 = vmatpush2.bf16.xpose.msra.mxu0 0
        %1702 = vmatprep.subr.bf16.mxu0 0
        %1703 = vmatpush2.bf16.xpose.msra.mxu0 0
        %1704 = vmatprep.subr.bf16.mxu0 0
        %1705 = vmatpush2.bf16.xpose.msra.mxu0 0
        %1706 = vmatprep.subr.bf16.mxu0 0
        %1707 = vmatpush2.bf16.xpose.msra.mxu0 0
        %1708 = vmatprep.subr.bf16.mxu0 0
        %1709 = vmatpush2.bf16.xpose.msra.mxu0 0
        %1710 = vmatprep.subr.bf16.mxu0 0
        %1711 = vmatpush2.bf16.xpose.msra.mxu0 0
        %1712 = vmatprep.subr.bf16.mxu0 0
        %1713 = vmatpush2.bf16.xpose.msra.mxu0 0
        %1714 = vmatprep.mubr.bf16.mxu0 %v1667
        %1715 = vmatmul.mubr.bf16.gmra.mxu0 %v1666
        %v1716 = vpop.f32.mrf.mxu0
        %v1717 = vadd.f32 0.0, %v1716
        %v1718 = vpop.f32.mrf.mxu0
        %v1719 = vpop.f32.mrf.mxu0
        %v1720 = vadd.f32 0.0, %v1719
        %v1721 = vpop.f32.mrf.mxu0
        %1722 = vmatprep.mubr.bf16.mxu0 %v1669
        %1723 = vmatmul.mubr.bf16.gmra.mxu0 %v1668
        %v1724 = vpop.f32.mrf.mxu0
        %v1725 = vadd.f32 0.0, %v1724
        %v1726 = vpop.f32.mrf.mxu0
        %v1727 = vpop.f32.mrf.mxu0
        %v1728 = vadd.f32 0.0, %v1727
        %v1729 = vpop.f32.mrf.mxu0
        %1730 = vmatprep.mubr.bf16.mxu0 %v1671
        %1731 = vmatmul.mubr.bf16.gmra.mxu0 %v1670
        %v1732 = vpop.f32.mrf.mxu0
        %v1733 = vadd.f32 0.0, %v1732
        %v1734 = vpop.f32.mrf.mxu0
        %v1735 = vpop.f32.mrf.mxu0
        %v1736 = vadd.f32 0.0, %v1735
        %v1737 = vpop.f32.mrf.mxu0
        %1738 = vmatprep.mubr.bf16.mxu0 %v1673
        %1739 = vmatmul.mubr.bf16.gmra.mxu0 %v1672
        %v1740 = vpop.f32.mrf.mxu0
        %v1741 = vadd.f32 0.0, %v1740
        %v1742 = vpop.f32.mrf.mxu0
        %v1743 = vpop.f32.mrf.mxu0
        %v1744 = vadd.f32 0.0, %v1743
        %v1745 = vpop.f32.mrf.mxu0
        %1746 = vmatprep.mubr.bf16.mxu0 %v1675
        %1747 = vmatmul.mubr.bf16.gmra.mxu0 %v1674
        %v1748 = vpop.f32.mrf.mxu0
        %v1749 = vadd.f32 0.0, %v1748
        %v1750 = vpop.f32.mrf.mxu0
        %v1751 = vpop.f32.mrf.mxu0
        %v1752 = vadd.f32 0.0, %v1751
        %v1753 = vpop.f32.mrf.mxu0
        %1754 = vmatprep.mubr.bf16.mxu0 %v1677
        %1755 = vmatmul.mubr.bf16.gmra.mxu0 %v1676
        %v1756 = vpop.f32.mrf.mxu0
        %v1757 = vadd.f32 0.0, %v1756
        %v1758 = vpop.f32.mrf.mxu0
        %v1759 = vpop.f32.mrf.mxu0
        %v1760 = vadd.f32 0.0, %v1759
        %v1761 = vpop.f32.mrf.mxu0
        %1762 = vmatprep.mubr.bf16.mxu0 %v1679
        %1763 = vmatmul.mubr.bf16.gmra.mxu0 %v1678
        %v1764 = vpop.f32.mrf.mxu0
        %v1765 = vadd.f32 0.0, %v1764
        %v1766 = vpop.f32.mrf.mxu0
        %v1767 = vpop.f32.mrf.mxu0
        %v1768 = vadd.f32 0.0, %v1767
        %v1769 = vpop.f32.mrf.mxu0
        %1770 = vmatprep.mubr.bf16.mxu0 %v1681
        %1771 = vmatmul.mubr.bf16.gmra.mxu0 %v1680
        %v1772 = vpop.f32.mrf.mxu0
        %v1773 = vadd.f32 0.0, %v1772
        %v1774 = vpop.f32.mrf.mxu0
        %v1775 = vpop.f32.mrf.mxu0
        %v1776 = vadd.f32 0.0, %v1775
        %v1777 = vpop.f32.mrf.mxu0
        %1778 = vdwg.mxu0
        %v1779 = vpack.c.bf16 %v1720, %v1717
        %v1780 = vpack.c.bf16 %v1728, %v1725
        %v1781 = vpack.c.bf16 %v1736, %v1733
        %v1782 = vpack.c.bf16 %v1744, %v1741
        %v1783 = vpack.c.bf16 %v1752, %v1749
        %v1784 = vpack.c.bf16 %v1760, %v1757
        %v1785 = vpack.c.bf16 %v1768, %v1765
        %v1786 = vpack.c.bf16 %v1776, %v1773
        %v1803 = vunpack.c.l.b16 %v327
        %v1804 = vunpack.c.l.b16 %v328
        %v1805 = vunpack.c.l.b16 %v329
        %v1806 = vunpack.c.l.b16 %v330
        %v1807 = vunpack.c.l.b16 %v331
        %v1808 = vunpack.c.l.b16 %v332
        %v1809 = vunpack.c.l.b16 %v333
        %v1810 = vunpack.c.l.b16 %v334
        %v1811 = vunpack.c.l.b16 %v335
        %v1812 = vunpack.c.l.b16 %v336
        %v1813 = vunpack.c.l.b16 %v337
        %v1814 = vunpack.c.l.b16 %v338
        %v1815 = vunpack.c.l.b16 %v339
        %v1816 = vunpack.c.l.b16 %v340
        %v1817 = vunpack.c.l.b16 %v341
        %v1818 = vunpack.c.l.b16 %v342
        %v1819 = vpack.c.b16 %v1804, %v1803
        %v1820 = vpack.c.b16 %v1806, %v1805
        %v1821 = vpack.c.b16 %v1808, %v1807
        %v1822 = vpack.c.b16 %v1810, %v1809
        %v1823 = vpack.c.b16 %v1812, %v1811
        %v1824 = vpack.c.b16 %v1814, %v1813
        %v1825 = vpack.c.b16 %v1816, %v1815
        %v1826 = vpack.c.b16 %v1818, %v1817
        %v1835 = vmul.bf16 %v1779, %v1819
        %v1836 = vmul.bf16 %v1780, %v1820
        %v1837 = vmul.bf16 %v1781, %v1821
        %v1838 = vmul.bf16 %v1782, %v1822
        %v1839 = vmul.bf16 %v1783, %v1823
        %v1840 = vmul.bf16 %v1784, %v1824
        %v1841 = vmul.bf16 %v1785, %v1825
        %v1842 = vmul.bf16 %v1786, %v1826
        %1843 = vmatprep.subr.bf16.mxu0 0
        %1844 = vmatpush1.bf16.msra.mxu0 %v1842
        %1845 = vmatprep.subr.bf16.mxu0 0
        %1846 = vmatpush1.bf16.msra.mxu0 %v1841
        %1847 = vmatprep.subr.bf16.mxu0 0
        %1848 = vmatpush1.bf16.msra.mxu0 %v1840
        %1849 = vmatprep.subr.bf16.mxu0 0
        %1850 = vmatpush1.bf16.msra.mxu0 %v1839
        %1851 = vmatprep.subr.bf16.mxu0 0
        %1852 = vmatpush1.bf16.msra.mxu0 %v1838
        %1853 = vmatprep.subr.bf16.mxu0 0
        %1854 = vmatpush1.bf16.msra.mxu0 %v1837
        %1855 = vmatprep.subr.bf16.mxu0 0
        %1856 = vmatpush1.bf16.msra.mxu0 %v1836
        %1857 = vmatprep.subr.bf16.mxu0 0
        %1858 = vmatpush1.bf16.msra.mxu0 %v1835
        %1859 = vmatprep.subr.bf16.mxu0 0
        %1860 = vmatpush2.bf16.msra.mxu0 0
        %1861 = vmatprep.subr.bf16.mxu0 0
        %1862 = vmatpush2.bf16.msra.mxu0 0
        %1863 = vmatprep.subr.bf16.mxu0 0
        %1864 = vmatpush2.bf16.msra.mxu0 0
        %1865 = vmatprep.subr.bf16.mxu0 0
        %1866 = vmatpush2.bf16.msra.mxu0 0
        %1867 = vmatprep.subr.bf16.mxu0 0
        %1868 = vmatpush2.bf16.msra.mxu0 0
        %1869 = vmatprep.subr.bf16.mxu0 0
        %1870 = vmatpush2.bf16.msra.mxu0 0
        %1871 = vmatprep.subr.bf16.mxu0 0
        %1872 = vmatpush2.bf16.msra.mxu0 0
        %1873 = vmatprep.subr.bf16.mxu0 0
        %1874 = vmatpush2.bf16.msra.mxu0 0
        %1875 = vmatprep.mubr.bf16.mxu0 0
        %1876 = vmatmul.mubr.bf16.gmra.mxu0 %v326
        %v1877 = vpop.f32.mrf.mxu0
        %v1878 = vadd.f32 0.0, %v1877
        %v1879 = vpop.f32.mrf.mxu0
        %v1880 = vpop.f32.mrf.mxu0
        %v1881 = vpop.f32.mrf.mxu0
        %1882 = vdwg.mxu0
        %v1883 = vpack.c.bf16 %v1878, %v1878
        %v1900 = vunpack.c.l.b16 %v310
        %v1901 = vunpack.c.l.b16 %v311
        %v1902 = vunpack.c.l.b16 %v312
        %v1903 = vunpack.c.l.b16 %v313
        %v1904 = vunpack.c.l.b16 %v314
        %v1905 = vunpack.c.l.b16 %v315
        %v1906 = vunpack.c.l.b16 %v316
        %v1907 = vunpack.c.l.b16 %v317
        %v1908 = vunpack.c.l.b16 %v318
        %v1909 = vunpack.c.l.b16 %v319
        %v1910 = vunpack.c.l.b16 %v320
        %v1911 = vunpack.c.l.b16 %v321
        %v1912 = vunpack.c.l.b16 %v322
        %v1913 = vunpack.c.l.b16 %v323
        %v1914 = vunpack.c.l.b16 %v324
        %v1915 = vunpack.c.l.b16 %v325
        %v1916 = vpack.c.b16 %v1901, %v1900
        %v1917 = vpack.c.b16 %v1903, %v1902
        %v1918 = vpack.c.b16 %v1905, %v1904
        %v1919 = vpack.c.b16 %v1907, %v1906
        %v1920 = vpack.c.b16 %v1909, %v1908
        %v1921 = vpack.c.b16 %v1911, %v1910
        %v1922 = vpack.c.b16 %v1913, %v1912
        %v1923 = vpack.c.b16 %v1915, %v1914
        %1932 = vmatprep.subr.bf16.mxu0 0
        %1933 = vmatpush1.bf16.msra.mxu0 %v1923
        %1934 = vmatprep.subr.bf16.mxu0 0
        %1935 = vmatpush1.bf16.msra.mxu0 %v1922
        %1936 = vmatprep.subr.bf16.mxu0 0
        %1937 = vmatpush1.bf16.msra.mxu0 %v1921
        %1938 = vmatprep.subr.bf16.mxu0 0
        %1939 = vmatpush1.bf16.msra.mxu0 %v1920
        %1940 = vmatprep.subr.bf16.mxu0 0
        %1941 = vmatpush1.bf16.msra.mxu0 %v1919
        %1942 = vmatprep.subr.bf16.mxu0 0
        %1943 = vmatpush1.bf16.msra.mxu0 %v1918
        %1944 = vmatprep.subr.bf16.mxu0 0
        %1945 = vmatpush1.bf16.msra.mxu0 %v1917
        %1946 = vmatprep.subr.bf16.mxu0 0
        %1947 = vmatpush1.bf16.msra.mxu0 %v1916
        %1948 = vmatprep.subr.bf16.mxu0 0
        %1949 = vmatpush2.bf16.msra.mxu0 0
        %1950 = vmatprep.subr.bf16.mxu0 0
        %1951 = vmatpush2.bf16.msra.mxu0 0
        %1952 = vmatprep.subr.bf16.mxu0 0
        %1953 = vmatpush2.bf16.msra.mxu0 0
        %1954 = vmatprep.subr.bf16.mxu0 0
        %1955 = vmatpush2.bf16.msra.mxu0 0
        %1956 = vmatprep.subr.bf16.mxu0 0
        %1957 = vmatpush2.bf16.msra.mxu0 0
        %1958 = vmatprep.subr.bf16.mxu0 0
        %1959 = vmatpush2.bf16.msra.mxu0 0
        %1960 = vmatprep.subr.bf16.mxu0 0
        %1961 = vmatpush2.bf16.msra.mxu0 0
        %1962 = vmatprep.subr.bf16.mxu0 0
        %1963 = vmatpush2.bf16.msra.mxu0 0
        %1964 = vmatprep.mubr.bf16.mxu0 0
        %1965 = vmatmul.mubr.bf16.gmra.mxu0 %v1883
        %v1966 = vpop.f32.mrf.mxu0
        %v1967 = vadd.f32 0.0, %v1966
        %v1968 = vpop.f32.mrf.mxu0
        %v1969 = vpop.f32.mrf.mxu0
        %v1970 = vpop.f32.mrf.mxu0
        %1971 = vdwg.mxu0
        %1973 = vset.pattern.permute.xlu0 0
        %1974 = vperm.xlu0 %1973, %v1967
        %v1975 = vpop.permute.xlu0 %1974
        %v1977 = vmul.f32 %v1975, %v439
        %v1978 = vmul.f32 %v1975, %v443
        %1979 = vset.pattern.permute.xlu0 1
        %1980 = vperm.xlu0 %1979, %v1967
        %v1981 = vpop.permute.xlu0 %1980
        %v1983 = vmul.f32 %v1981, %v665
        %v1984 = vmul.f32 %v1981, %v669
        %v1985 = vadd.f32 %v1977, %v1983
        %v1986 = vadd.f32 %v1978, %v1984
        %1987 = vset.pattern.permute.xlu0 2
        %1988 = vperm.xlu0 %1987, %v1967
        %v1989 = vpop.permute.xlu0 %1988
        %v1991 = vmul.f32 %v1989, %v939
        %v1992 = vmul.f32 %v1989, %v943
        %v1993 = vadd.f32 %v1985, %v1991
        %v1994 = vadd.f32 %v1986, %v1992
        %1995 = vset.pattern.permute.xlu0 3
        %1996 = vperm.xlu0 %1995, %v1967
        %v1997 = vpop.permute.xlu0 %1996
        %v1999 = vmul.f32 %v1997, %v1213
        %v2000 = vmul.f32 %v1997, %v1217
        %v2001 = vadd.f32 %v1993, %v1999
        %v2002 = vadd.f32 %v1994, %v2000
        %2004 = vset.pattern.permute.xlu0 0
        %2005 = vperm.xlu0 %2004, %v343
        %v2006 = vpop.permute.xlu0 %2005
        %v2008 = vadd.f32 %v2001, %v2006
        %v2009 = vadd.f32 %v2002, %v2006
        %v2012 = vcombine.low %v2008, %v2009
        %2014 = vst [vmem:[%s271] sm:$0xff] %v2012
        %s2015 = sand.u32 %s181, 1
        %s2016 = scalar_lea.sflag [#allocation3], %s2015
        %s2017 = sand.u32 %s181, 1
        %s2018 = smul.addr %s2017, 8
        %s2019 = scalar_lea.vmem [#allocation2], %s2018
        // Predicated region
        $region49: #{tpu_custom_call.1} parent=47 // pred_check
          %p2020 = pneg %p191
        $region50: #{tpu_custom_call.1} parent=47 // pred_check_branch
          %2022 = sbr.rel (%p2020) target = $region52
        $region51: #{tpu_custom_call.1} parent=47 // pred_region
          %s2024 = ssub.s32 128, 128
          %2025 = vsyncadd %s2016, %s2024
          %s2026 = smul.addr %s21, 2
          %s2027 = smul.addr %s2026, 64
          %s2028 = scalar_lea.hbm %s7, %s2027
          %s2030 = sshll.u32 %s2019, 4
          %s2031 = int_to_ptr.vmem [resolvable:$true] %s2030
          %2033 = dma.vmem_to_hbm [thread:$0]  %s2031, 128, %s2028, %s2016
        $region52: #{tpu_custom_call.1} parent=47 // pred_fallthru
          _
      $region48: #{tpu_custom_call.1} parent=5 // pred_fallthru
        _
      %p2034 = scmp.le.s32.totalorder 2, %s16
      // Predicated region
      $region53: #{tpu_custom_call.1} parent=5 // pred_check
        %p2035 = pneg %p2034
      $region54: #{tpu_custom_call.1} parent=5 // pred_check_branch
        %2037 = sbr.rel (%p2035) target = $region56
      $region55: #{tpu_custom_call.1} parent=5 // pred_region
        %s2038 = ssub.s32 %s16, 2
        // Predicated region
        $region57: #{tpu_custom_call.1} parent=55 // pred_check
          %p2039 = pneg %p197
        $region58: #{tpu_custom_call.1} parent=55 // pred_check_branch
          %2041 = sbr.rel (%p2039) target = $region60
        $region59: #{tpu_custom_call.1} parent=55 // pred_region
          %s2042 = sand.u32 %s182, 1
          %s2043 = scalar_lea.sflag [#allocation3], %s2042
          %s2044 = sand.u32 %s182, 1
          %s2045 = smul.addr %s2044, 8
          %s2046 = scalar_lea.vmem [#allocation2], %s2045
          %2047 = dma.done %s2043, 128
        $region60: #{tpu_custom_call.1} parent=55 // pred_fallthru
          _
      $region56: #{tpu_custom_call.1} parent=5 // pred_fallthru
        _
    $region6: #{tpu_custom_call.1} parent=1 // loop_footer
      %s20 = sadd.s32 1, %s16
    $region7: #{tpu_custom_call.1} parent=1 // loop_footer_branch
      %15 = sbr.rel target = $region3
    $region8: #{tpu_custom_call.1} parent=1 // loop_exit
      _
    %2048 = vsyncpa [#allocation3], 1
    %s2049 = scalar_lea.sflag [#allocation3], 1
    %2050 = vsyncpa %s2049, 1

</llo_original>
